<compile_context>
chip_gen: v7x
topology: tpu7x:2x2x1
jax: 0.10.0
libtpu: 0.0.40
codegen_flags: <defaults>
</compile_context>

<pallas_src>
import jax
import jax.numpy as jnp
from jax.experimental import pallas as pl
from jax.experimental.pallas import tpu as pltpu


def _round_up(x, m):
    return (x + m - 1) // m * m


def pam_forward(x, params, *, tile_n=512):
    """x: (B, C, H, W) NCHW, like the PyTorch module."""
    B, C, H, W = x.shape
    Hp, Wp = H // 2, W // 2
    N, Np = H * W, Hp * Wp
    K = params["wq"].shape[1]
    dtype = x.dtype

    # ---- glue: 2x2 max pool (floor, like nn.MaxPool2d(kernel_size=2)) ----
    xc = x[:, :, :Hp * 2, :Wp * 2]
    xp = xc.reshape(B, C, Hp, 2, Wp, 2).max(axis=(3, 5))

    # NCHW -> channel-last flattened
    x_flat = x.reshape(B, C, N).transpose(0, 2, 1)        # (B, N, C)
    xp_flat = xp.reshape(B, C, Np).transpose(0, 2, 1)     # (B, Np, C)

    # Key projection once per batch (tiny matmul), already transposed to (K, Np)
    # so the kernel's energy matmul needs no transpose and no re-projection.
    kT = (jnp.einsum("bnc,ck->bnk", xp_flat, params["wk"])
          + params["bk"]).transpose(0, 2, 1)               # (B, K, Np)

    # ---- lane-dense padding: C, K -> multiples of 128; gamma fused at col K ----
    Cp = _round_up(C, 128)
    Kp = _round_up(K + 1, 128)                 # reserve column K for gamma logit
    TN = min(tile_n, _round_up(N, 8))          # query-tile rows (mult of 8, f32)
    Npad = _round_up(N, TN)

    x_p = jnp.zeros((B, Npad, Cp), dtype).at[:, :N, :C].set(x_flat)
    xp_p = jnp.zeros((B, Np, Cp), dtype).at[:, :, :C].set(xp_flat)
    kT_p = jnp.zeros((B, Kp, Np), dtype).at[:, :K, :].set(kT.astype(dtype))

    # Fused query+gamma weights: columns [0,K) = wq, column K = wg, rest zero.
    wqg = jnp.zeros((Cp, Kp), dtype)
    wqg = wqg.at[:C, :K].set(params["wq"].astype(dtype))
    wqg = wqg.at[:C, K].set(params["wg"][:, 0].astype(dtype))
    bqg = jnp.zeros((1, Kp), jnp.float32)
    bqg = bqg.at[:, :K].set(params["bq"].astype(jnp.float32))
    bqg = bqg.at[:, K].set(params["bg"][0, 0].astype(jnp.float32))

    gamma_col = K

    def kernel(x_ref, xp_ref, kT_ref, wqg_ref, bqg_ref, out_ref):
        xt = x_ref[0]                                        # (TN, Cp)  input dtype
        xpv = xp_ref[0]                                      # (Np, Cp)
        kTv = kT_ref[0]                                      # (Kp, Np)

        # fused query + gamma projection (f32 accumulation, operands in input dtype)
        qg = jnp.dot(xt, wqg_ref[...],
                     preferred_element_type=jnp.float32) + bqg_ref[...]   # (TN, Kp)

        # energy: rows >= K of kT are zero, so gamma/pad columns contribute nothing
        energy = jnp.dot(qg.astype(kTv.dtype), kTv,
                         preferred_element_type=jnp.float32)              # (TN, Np)

        # numerically stable softmax over Np (f32 math; EUP reciprocal)
        e_max = jnp.max(energy, axis=-1, keepdims=True)
        p = jnp.exp(energy - e_max)
        denom = jnp.sum(p, axis=-1, keepdims=True)
        attn = p * pl.reciprocal(denom, approx=True)                      # (TN, Np)

        # out = attn @ xp   (value matmul, f32 accumulation)
        out = jnp.dot(attn.astype(xpv.dtype), xpv,
                      preferred_element_type=jnp.float32)                 # (TN, Cp)

        # gamma blend: gamma = sigmoid(fused column K)
        gamma = jax.nn.sigmoid(qg[:, gamma_col:gamma_col + 1])            # (TN, 1)
        out_ref[0] = ((1.0 - gamma) * out
                      + gamma * xt.astype(jnp.float32)).astype(out_ref.dtype)

    grid = (B, Npad // TN)

    itemsize = jnp.dtype(dtype).itemsize
    cost = pl.CostEstimate(
        flops=2 * B * Npad * (Cp * Kp + Kp * Np + Np * Cp),
        transcendentals=B * Npad * (Np + 2),
        bytes_accessed=(x_p.size + xp_p.size + kT_p.size + wqg.size
                        + B * Npad * Cp) * itemsize + bqg.size * 4,
    )

    out_p = pl.pallas_call(
        kernel,
        out_shape=jax.ShapeDtypeStruct((B, Npad, Cp), dtype),
        grid=grid,
        in_specs=[
            pl.BlockSpec((1, TN, Cp), lambda b, n: (b, n, 0)),   # x tile
            pl.BlockSpec((1, Np, Cp), lambda b, n: (b, 0, 0)),   # pooled values (per batch)
            pl.BlockSpec((1, Kp, Np), lambda b, n: (b, 0, 0)),   # kT (per batch)
            pl.BlockSpec((Cp, Kp), lambda b, n: (0, 0)),         # fused q+gamma weights
            pl.BlockSpec((1, Kp), lambda b, n: (0, 0)),          # fused bias
        ],
        out_specs=pl.BlockSpec((1, TN, Cp), lambda b, n: (b, n, 0)),
        compiler_params=pltpu.CompilerParams(
            dimension_semantics=("parallel", "parallel"),
            vmem_limit_bytes=32 * 1024 * 1024),
        cost_estimate=cost,
    )(x_p, xp_p, kT_p, wqg, bqg)

    # strip padding, back to NCHW
    out_flat = out_p[:, :N, :C]
    return out_flat.transpose(0, 2, 1).reshape(B, C, H, W)


def pam_reference(x, params):
    """Pure-JAX reference mirroring the PyTorch forward (for verification)."""
    B, C, H, W = x.shape
    Hp, Wp = H // 2, W // 2
    xp = x[:, :, :Hp * 2, :Wp * 2].reshape(B, C, Hp, 2, Wp, 2).max(axis=(3, 5))
    q = jnp.einsum("bchw,ck->bkhw", x, params["wq"]) + params["bq"].reshape(1, -1, 1, 1)
    k = jnp.einsum("bchw,ck->bkhw", xp, params["wk"]) + params["bk"].reshape(1, -1, 1, 1)
    proj_q = q.reshape(B, -1, H * W).transpose(0, 2, 1)            # (B, N, K)
    proj_k = k.reshape(B, -1, Hp * Wp)                             # (B, K, Np)
    energy = jnp.einsum("bnk,bkm->bnm", proj_q, proj_k)
    attn = jax.nn.softmax(energy, axis=-1)
    proj_v = xp.reshape(B, C, Hp * Wp)                             # (B, C, Np)
    out = jnp.einsum("bcm,bnm->bcn", proj_v, attn).reshape(B, C, H, W)
    g = jnp.einsum("bchw,co->bohw", x, params["wg"]) + params["bg"].reshape(1, 1, 1, 1)
    gamma = jax.nn.sigmoid(g)
    return (1.0 - gamma) * out + gamma * x


def init_params(key, in_dim, key_dim):
    ks = jax.random.split(key, 6)
    s = 0.1
    return {
        "wq": jax.random.normal(ks[0], (in_dim, key_dim), jnp.float32) * s,
        "bq": jax.random.normal(ks[1], (1, key_dim), jnp.float32) * s,
        "wk": jax.random.normal(ks[2], (in_dim, key_dim), jnp.float32) * s,
        "bk": jax.random.normal(ks[3], (1, key_dim), jnp.float32) * s,
        "wg": jax.random.normal(ks[4], (in_dim, 1), jnp.float32) * s,
        "bg": jax.random.normal(ks[5], (1, 1), jnp.float32) * s,
    }


if __name__ == "__main__":
    key = jax.random.PRNGKey(0)
    k_x, k_p = jax.random.split(key)

    B, C, H, W = 2, 4, 16, 16          # in_dim = 4
    key_dim = 4
    x = jax.random.normal(k_x, (B, C, H, W), jnp.float32)
    params = init_params(k_p, C, key_dim)

    pam = jax.jit(pam_forward)
    out = jax.block_until_ready(pam(x, params))

    ref = pam_reference(x, params)
    assert out.shape == (B, C, H, W)
    max_err = float(jnp.max(jnp.abs(out - ref)))
    # tolerance accounts for the approx (EUP) reciprocal in the softmax
    assert jnp.allclose(out, ref, atol=3e-3, rtol=3e-3), f"mismatch vs reference: {max_err}"

    print("KERNEL_OK")
</pallas_src>

<mosaic_0001>
module attributes {stable_mosaic.version = 11 : i64} {
  func.func @kernel(%arg0: i32, %arg1: i32, %arg2: memref<1x256x128xf32, #tpu.memory_space<vmem>>, %arg3: memref<1x64x128xf32, #tpu.memory_space<vmem>>, %arg4: memref<1x128x64xf32, #tpu.memory_space<vmem>>, %arg5: memref<128x128xf32, #tpu.memory_space<vmem>>, %arg6: memref<1x128xf32, #tpu.memory_space<vmem>>, %arg7: memref<1x256x128xf32, #tpu.memory_space<vmem>>) attributes {dimension_semantics = [#tpu.dimension_semantics<parallel>, #tpu.dimension_semantics<parallel>], iteration_bounds = array<i64: 2, 1>, scalar_prefetch = 0 : i64, scratch_operands = 0 : i64, tpu.core_type = #tpu.core_type<tc>, window_params = [{transform_indices = @transform_0, window_bounds = array<i64: 1, 256, 128>}, {transform_indices = @transform_1, window_bounds = array<i64: 1, 64, 128>}, {transform_indices = @transform_2, window_bounds = array<i64: 1, 128, 64>}, {pipeline_mode = #tpu.pipeline_mode<synchronous>, transform_indices = @transform_3, window_bounds = array<i64: 128, 128>}, {pipeline_mode = #tpu.pipeline_mode<synchronous>, transform_indices = @transform_4, window_bounds = array<i64: 1, 128>}, {transform_indices = @transform_5, window_bounds = array<i64: 1, 256, 128>}]} {
    %c0 = arith.constant 0 : index
    %c0_0 = arith.constant 0 : index
    %c0_1 = arith.constant 0 : index
    %0 = vector.load %arg2[%c0, %c0_0, %c0_1] : memref<1x256x128xf32, #tpu.memory_space<vmem>>, vector<1x256x128xf32>
    %1 = vector.shape_cast %0 : vector<1x256x128xf32> to vector<256x128xf32>
    %c0_2 = arith.constant 0 : index
    %c0_3 = arith.constant 0 : index
    %c0_4 = arith.constant 0 : index
    %2 = vector.load %arg3[%c0_2, %c0_3, %c0_4] : memref<1x64x128xf32, #tpu.memory_space<vmem>>, vector<1x64x128xf32>
    %3 = vector.shape_cast %2 : vector<1x64x128xf32> to vector<64x128xf32>
    %c0_5 = arith.constant 0 : index
    %c0_6 = arith.constant 0 : index
    %c0_7 = arith.constant 0 : index
    %4 = vector.load %arg4[%c0_5, %c0_6, %c0_7] : memref<1x128x64xf32, #tpu.memory_space<vmem>>, vector<1x128x64xf32>
    %5 = vector.shape_cast %4 : vector<1x128x64xf32> to vector<128x64xf32>
    %c0_8 = arith.constant 0 : index
    %c0_9 = arith.constant 0 : index
    %6 = vector.load %arg5[%c0_8, %c0_9] : memref<128x128xf32, #tpu.memory_space<vmem>>, vector<128x128xf32>
    %cst = arith.constant dense<0.000000e+00> : vector<256x128xf32>
    %7 = tpu.matmul %1, %6, %cst {dimension_numbers = #tpu.dot_dimension_numbers<[1], [0], [0], [1], [0, 0, 1, 1], [], []>} : vector<256x128xf32>, vector<128x128xf32>, vector<256x128xf32> -> vector<256x128xf32>
    %c0_10 = arith.constant 0 : index
    %c0_11 = arith.constant 0 : index
    %8 = vector.load %arg6[%c0_10, %c0_11] : memref<1x128xf32, #tpu.memory_space<vmem>>, vector<1x128xf32>
    %9 = vector.broadcast %8 : vector<1x128xf32> to vector<256x128xf32>
    %10 = arith.addf %7, %9 : vector<256x128xf32>
    %cst_12 = arith.constant dense<0.000000e+00> : vector<256x64xf32>
    %11 = tpu.matmul %10, %5, %cst_12 {dimension_numbers = #tpu.dot_dimension_numbers<[1], [0], [0], [1], [0, 0, 1, 1], [], []>} : vector<256x128xf32>, vector<128x64xf32>, vector<256x64xf32> -> vector<256x64xf32>
    %cst_13 = arith.constant dense<0xFF800000> : vector<256xf32>
    %12 = vector.multi_reduction <maximumf>, %11, %cst_13 [1] : vector<256x64xf32> to vector<256xf32>
    %13 = vector.shape_cast %12 : vector<256xf32> to vector<256x1xf32>
    %14 = vector.broadcast %13 : vector<256x1xf32> to vector<256x64xf32>
    %15 = arith.subf %11, %14 : vector<256x64xf32>
    %16 = math.exp %15 : vector<256x64xf32>
    %cst_14 = arith.constant dense<0.000000e+00> : vector<256xf32>
    %17 = vector.multi_reduction <add>, %16, %cst_14 [1] : vector<256x64xf32> to vector<256xf32>
    %18 = vector.shape_cast %17 : vector<256xf32> to vector<256x1xf32>
    %19 = tpu.reciprocal %18 {approx = true} : vector<256x1xf32> -> vector<256x1xf32>
    %20 = vector.broadcast %19 : vector<256x1xf32> to vector<256x64xf32>
    %21 = arith.mulf %16, %20 : vector<256x64xf32>
    %cst_15 = arith.constant dense<0.000000e+00> : vector<256x128xf32>
    %22 = tpu.matmul %21, %3, %cst_15 {dimension_numbers = #tpu.dot_dimension_numbers<[1], [0], [0], [1], [0, 0, 1, 1], [], []>} : vector<256x64xf32>, vector<64x128xf32>, vector<256x128xf32> -> vector<256x128xf32>
    %23 = vector.extract_strided_slice %10 {offsets = [0, 4], sizes = [256, 1], strides = [1, 1]} : vector<256x128xf32> to vector<256x1xf32>
    %24 = arith.negf %23 : vector<256x1xf32>
    %25 = math.exp %24 : vector<256x1xf32>
    %cst_16 = arith.constant 1.000000e+00 : f32
    %26 = vector.broadcast %cst_16 : f32 to vector<256x1xf32>
    %27 = arith.addf %26, %25 : vector<256x1xf32>
    %28 = arith.divf %26, %27 : vector<256x1xf32>
    %cst_17 = arith.constant 1.000000e+00 : f32
    %29 = vector.broadcast %cst_17 : f32 to vector<256x1xf32>
    %30 = arith.subf %29, %28 : vector<256x1xf32>
    %31 = vector.broadcast %30 : vector<256x1xf32> to vector<256x128xf32>
    %32 = arith.mulf %31, %22 : vector<256x128xf32>
    %33 = vector.broadcast %28 : vector<256x1xf32> to vector<256x128xf32>
    %34 = arith.mulf %33, %1 : vector<256x128xf32>
    %35 = arith.addf %32, %34 : vector<256x128xf32>
    %c0_18 = arith.constant 0 : index
    %c0_19 = arith.constant 0 : index
    %c0_20 = arith.constant 0 : index
    %36 = vector.load %arg7[%c0_18, %c0_19, %c0_20] : memref<1x256x128xf32, #tpu.memory_space<vmem>>, vector<1x256x128xf32>
    %37 = vector.shape_cast %36 : vector<1x256x128xf32> to vector<256x128xf32>
    %38 = vector.shape_cast %35 : vector<256x128xf32> to vector<1x256x128xf32>
    tpu.vector_store %arg7[%c0_18, %c0_19, %c0_20], %38 {strides = array<i32>} : memref<1x256x128xf32, #tpu.memory_space<vmem>>, vector<1x256x128xf32>,
    return
  }
  func.func @transform_0(%arg0: i32, %arg1: i32) -> (i32, i32, i32) {
    %c0_i32 = arith.constant 0 : i32
    %c0_i32_0 = arith.constant 0 : i32
    return %arg0, %arg1, %c0_i32 : i32, i32, i32
  }
  func.func @transform_1(%arg0: i32, %arg1: i32) -> (i32, i32, i32) {
    %c0_i32 = arith.constant 0 : i32
    %c0_i32_0 = arith.constant 0 : i32
    %c0_i32_1 = arith.constant 0 : i32
    return %arg0, %c0_i32, %c0_i32_0 : i32, i32, i32
  }
  func.func @transform_2(%arg0: i32, %arg1: i32) -> (i32, i32, i32) {
    %c0_i32 = arith.constant 0 : i32
    %c0_i32_0 = arith.constant 0 : i32
    %c0_i32_1 = arith.constant 0 : i32
    return %arg0, %c0_i32, %c0_i32_0 : i32, i32, i32
  }
  func.func @transform_3(%arg0: i32, %arg1: i32) -> (i32, i32) {
    %c0_i32 = arith.constant 0 : i32
    %c0_i32_0 = arith.constant 0 : i32
    %c0_i32_1 = arith.constant 0 : i32
    return %c0_i32, %c0_i32_0 : i32, i32
  }
  func.func @transform_4(%arg0: i32, %arg1: i32) -> (i32, i32) {
    %c0_i32 = arith.constant 0 : i32
    %c0_i32_0 = arith.constant 0 : i32
    %c0_i32_1 = arith.constant 0 : i32
    return %c0_i32, %c0_i32_0 : i32, i32
  }
  func.func @transform_5(%arg0: i32, %arg1: i32) -> (i32, i32, i32) {
    %c0_i32 = arith.constant 0 : i32
    %c0_i32_0 = arith.constant 0 : i32
    return %arg0, %arg1, %c0_i32 : i32, i32, i32
  }
}

</mosaic_0001>

<llo_original>
// kernel: pam_forward.1
$region0: #{pam_forward.1}
  #allocation0 [shape = 'u32[]', space=smem, size = 0x4, offset = 0x4, fixed_abs, tag = 'smem constant byte address 0x4 - core index']
  #allocation1 [shape = 'u32[144,128]{1,0:T(1,128)}', space=vmem, size = 0x12000, scoped, tag = 'internal scratch']
  %s0 = inlined_call_operand.vmem [shape: f32[2,256,128], index: 0, kind: input, shape index: {}]
  %s1 = inlined_call_operand.vmem [shape: f32[2,64,128], index: 1, kind: input, shape index: {}]
  %s2 = inlined_call_operand.vmem [shape: f32[2,128,64], index: 2, kind: input, shape index: {}]
  %s3 = inlined_call_operand.vmem [shape: f32[128,128], index: 3, kind: input, shape index: {}]
  %s4 = inlined_call_operand.vmem [shape: f32[1,128], index: 4, kind: input, shape index: {}]
  %s5 = inlined_call_operand.vmem [shape: f32[2,256,128], index: 5, kind: output, shape index: {}]
  %s6 = sld [smem:[#allocation0]]
  $region53: #{pam_forward.1} parent=0
    _
  %s8 = ssub.s32 1, %s6
  %s9 = scalar_select 0, %s8, %s6
  loop: start=0, step=1, limit=4
  $region2: #{pam_forward.1} parent=0 // loop_pre_header
    _
  $region3: #{pam_forward.1} parent=0 // loop_header
    %s11 = sphi 0, %s15
    %p12 = scmp.ge.s32.totalorder %s11, 4
    %s18 = sphi 0, %s30
    %s19 = sphi 0, %s26
    %s20 = sphi 0, %s18
    %s21 = sphi 0, %s19
    %s22 = sphi 0, %s20
    %s23 = sphi 0, %s21
    %s35 = sphi 0, %s37
    %s38 = sphi 0, %s35
    %s39 = sphi 0, %s38
    %s55 = sphi 0, %s39
    %s61 = sphi 0, %s63
    %s64 = sphi 0, %s61
    %s65 = sphi 0, %s64
    %s81 = sphi 0, %s65
    %s87 = sphi 0, %s89
    %s90 = sphi 0, %s87
    %s91 = sphi 0, %s90
    %s107 = sphi 0, %s91
    %s111 = sphi 0, %s111
    %s113 = sphi 0, %s111
    %s114 = sphi 0, %s113
    %s128 = sphi 0, %s114
    %s132 = sphi 0, %s132
    %s134 = sphi 0, %s132
    %s135 = sphi 0, %s134
    %s149 = sphi 0, %s135
    %s157 = sphi 0, %s159
    %s160 = sphi 0, %s157
    %s161 = sphi 0, %s160
    %s177 = sphi 0, %s161
  $region4: #{pam_forward.1} parent=0 // loop_header_branch
    %14 = sbr.rel (%p12) target = $region8
  $region5: #{pam_forward.1} parent=0 // loop_body
    %s16 = ssub.s32 %s11, 1
    %s17 = ssub.s32 %s11, 2
    %s24 = sadd.s32 1, %s19
    %p25 = scmp.ge.s32.totalorder %s24, 1
    %s26 = scalar_select %p25, 0, %s24
    %s27 = sadd.s32 1, %s18
    %s28 = scalar_select %p25, %s27, %s18
    %p29 = scmp.ge.s32.totalorder %s28, 2
    %s30 = scalar_select %p29, 0, %s28
    %s31 = ssub.s32 %s18, %s30
    %s32 = ssub.s32 %s19, %s26
    %s33 = sor.u32 %s31, %s32
    %p34 = scmp.eq.s32.totalorder %s33, 0
    %s36 = sadd.s32 %s35, 1
    %s37 = scalar_select %p34, %s35, %s36
    %p40 = pneg %p34
    %p41 = scmp.eq.s32.totalorder %s11, 1
    %p42 = por %p40, %p41
    %p43 = scmp.ne.s32.totalorder %s35, %s38
    %p44 = scmp.eq.s32.totalorder %s11, 0
    %p45 = por %p43, %p44
    %p46 = scmp.ne.s32.totalorder %s35, %s38
    %p47 = scmp.eq.s32.totalorder %s16, 1
    %p48 = por %p46, %p47
    %p49 = scmp.ne.s32.totalorder %s38, %s39
    %p50 = scmp.eq.s32.totalorder %s16, 0
    %p51 = por %p49, %p50
    %p52 = scmp.ne.s32.totalorder %s38, %s39
    %p53 = scmp.eq.s32.totalorder %s17, 1
    %p54 = por %p52, %p53
    %p56 = scmp.ne.s32.totalorder %s39, %s55
    %p57 = scmp.eq.s32.totalorder %s17, 0
    %p58 = por %p56, %p57
    %s59 = ssub.s32 %s18, %s30
    %p60 = scmp.eq.s32.totalorder %s59, 0
    %s62 = sadd.s32 %s61, 1
    %s63 = scalar_select %p60, %s61, %s62
    %p66 = pneg %p60
    %p67 = scmp.eq.s32.totalorder %s11, 1
    %p68 = por %p66, %p67
    %p69 = scmp.ne.s32.totalorder %s61, %s64
    %p70 = scmp.eq.s32.totalorder %s11, 0
    %p71 = por %p69, %p70
    %p72 = scmp.ne.s32.totalorder %s61, %s64
    %p73 = scmp.eq.s32.totalorder %s16, 1
    %p74 = por %p72, %p73
    %p75 = scmp.ne.s32.totalorder %s64, %s65
    %p76 = scmp.eq.s32.totalorder %s16, 0
    %p77 = por %p75, %p76
    %p78 = scmp.ne.s32.totalorder %s64, %s65
    %p79 = scmp.eq.s32.totalorder %s17, 1
    %p80 = por %p78, %p79
    %p82 = scmp.ne.s32.totalorder %s65, %s81
    %p83 = scmp.eq.s32.totalorder %s17, 0
    %p84 = por %p82, %p83
    %s85 = ssub.s32 %s18, %s30
    %p86 = scmp.eq.s32.totalorder %s85, 0
    %s88 = sadd.s32 %s87, 1
    %s89 = scalar_select %p86, %s87, %s88
    %p92 = pneg %p86
    %p93 = scmp.eq.s32.totalorder %s11, 1
    %p94 = por %p92, %p93
    %p95 = scmp.ne.s32.totalorder %s87, %s90
    %p96 = scmp.eq.s32.totalorder %s11, 0
    %p97 = por %p95, %p96
    %p98 = scmp.ne.s32.totalorder %s87, %s90
    %p99 = scmp.eq.s32.totalorder %s16, 1
    %p100 = por %p98, %p99
    %p101 = scmp.ne.s32.totalorder %s90, %s91
    %p102 = scmp.eq.s32.totalorder %s16, 0
    %p103 = por %p101, %p102
    %p104 = scmp.ne.s32.totalorder %s90, %s91
    %p105 = scmp.eq.s32.totalorder %s17, 1
    %p106 = por %p104, %p105
    %p108 = scmp.ne.s32.totalorder %s91, %s107
    %p109 = scmp.eq.s32.totalorder %s17, 0
    %p110 = por %p108, %p109
    %s112 = sadd.s32 %s111, 1
    %p115 = scmp.eq.s32.totalorder %s11, 1
    %p116 = scmp.ne.s32.totalorder %s111, %s113
    %p117 = scmp.eq.s32.totalorder %s11, 0
    %p118 = por %p116, %p117
    %p119 = scmp.ne.s32.totalorder %s111, %s113
    %p120 = scmp.eq.s32.totalorder %s16, 1
    %p121 = por %p119, %p120
    %p122 = scmp.ne.s32.totalorder %s113, %s114
    %p123 = scmp.eq.s32.totalorder %s16, 0
    %p124 = por %p122, %p123
    %p125 = scmp.ne.s32.totalorder %s113, %s114
    %p126 = scmp.eq.s32.totalorder %s17, 1
    %p127 = por %p125, %p126
    %p129 = scmp.ne.s32.totalorder %s114, %s128
    %p130 = scmp.eq.s32.totalorder %s17, 0
    %p131 = por %p129, %p130
    %s133 = sadd.s32 %s132, 1
    %p136 = scmp.eq.s32.totalorder %s11, 1
    %p137 = scmp.ne.s32.totalorder %s132, %s134
    %p138 = scmp.eq.s32.totalorder %s11, 0
    %p139 = por %p137, %p138
    %p140 = scmp.ne.s32.totalorder %s132, %s134
    %p141 = scmp.eq.s32.totalorder %s16, 1
    %p142 = por %p140, %p141
    %p143 = scmp.ne.s32.totalorder %s134, %s135
    %p144 = scmp.eq.s32.totalorder %s16, 0
    %p145 = por %p143, %p144
    %p146 = scmp.ne.s32.totalorder %s134, %s135
    %p147 = scmp.eq.s32.totalorder %s17, 1
    %p148 = por %p146, %p147
    %p150 = scmp.ne.s32.totalorder %s135, %s149
    %p151 = scmp.eq.s32.totalorder %s17, 0
    %p152 = por %p150, %p151
    %s153 = ssub.s32 %s18, %s30
    %s154 = ssub.s32 %s19, %s26
    %s155 = sor.u32 %s153, %s154
    %p156 = scmp.eq.s32.totalorder %s155, 0
    %s158 = sadd.s32 %s157, 1
    %s159 = scalar_select %p156, %s157, %s158
    %p162 = pneg %p156
    %p163 = scmp.eq.s32.totalorder %s11, 1
    %p164 = por %p162, %p163
    %p165 = scmp.ne.s32.totalorder %s157, %s160
    %p166 = scmp.eq.s32.totalorder %s11, 0
    %p167 = por %p165, %p166
    %p168 = scmp.ne.s32.totalorder %s157, %s160
    %p169 = scmp.eq.s32.totalorder %s16, 1
    %p170 = por %p168, %p169
    %p171 = scmp.ne.s32.totalorder %s160, %s161
    %p172 = scmp.eq.s32.totalorder %s16, 0
    %p173 = por %p171, %p172
    %p174 = scmp.ne.s32.totalorder %s160, %s161
    %p175 = scmp.eq.s32.totalorder %s17, 1
    %p176 = por %p174, %p175
    %p178 = scmp.ne.s32.totalorder %s161, %s177
    %p179 = scmp.eq.s32.totalorder %s17, 0
    %p180 = por %p178, %p179
    %p181 = scmp.le.s32.totalorder 1, %s11
    %p182 = scmp.lt.s32.totalorder %s11, 3
    %p183 = pnand %p181, %p182
    %p184 = pneg %p183
    // Predicated region
    $region9: #{pam_forward.1} parent=5 // pred_check
      _
    $region10: #{pam_forward.1} parent=5 // pred_check_branch
      %186 = sbr.rel (%p183) target = $region12
    $region11: #{pam_forward.1} parent=5 // pred_region
      %s187 = ssub.s32 %s11, 1
      // Predicated region
      $region13: #{pam_forward.1} parent=11 // pred_check
        %p188 = pneg %p124
      $region14: #{pam_forward.1} parent=11 // pred_check_branch
        %190 = sbr.rel (%p188) target = $region16
      $region15: #{pam_forward.1} parent=11 // pred_region
        _
      $region16: #{pam_forward.1} parent=11 // pred_fallthru
        _
      // Predicated region
      $region17: #{pam_forward.1} parent=11 // pred_check
        %p191 = pneg %p145
      $region18: #{pam_forward.1} parent=11 // pred_check_branch
        %193 = sbr.rel (%p191) target = $region20
      $region19: #{pam_forward.1} parent=11 // pred_region
        _
      $region20: #{pam_forward.1} parent=11 // pred_fallthru
        _
    $region12: #{pam_forward.1} parent=5 // pred_fallthru
      _
    %p194 = scmp.lt.s32.totalorder %s11, 2
    // Predicated region
    $region21: #{pam_forward.1} parent=5 // pred_check
      %p195 = pneg %p194
    $region22: #{pam_forward.1} parent=5 // pred_check_branch
      %197 = sbr.rel (%p195) target = $region24
    $region23: #{pam_forward.1} parent=5 // pred_region
      // Predicated region
      $region25: #{pam_forward.1} parent=23 // pred_check
        %p198 = pneg %p45
      $region26: #{pam_forward.1} parent=23 // pred_check_branch
        %200 = sbr.rel (%p198) target = $region28
      $region27: #{pam_forward.1} parent=23 // pred_region
        %s201 = smul.u32 32, %s19
        %p202 = scmp.lt.s32.totalorder %s18, 1
        %s203 = scalar_select %p202, %s18, 1
        %p204 = scmp.lt.s32.totalorder %s201, 31
        %s205 = scalar_select %p204, %s201, 31
        %s206 = smul.addr %s203, 32
        %s207 = sadd.s32 %s205, %s206
        %s208 = smul.addr %s207, 8
        %s209 = scalar_lea.vmem %s0, %s208
        %s210 = smul.u32 32, %s19
      $region28: #{pam_forward.1} parent=23 // pred_fallthru
        _
      // Predicated region
      $region29: #{pam_forward.1} parent=23 // pred_check
        %p211 = pneg %p71
      $region30: #{pam_forward.1} parent=23 // pred_check_branch
        %213 = sbr.rel (%p211) target = $region32
      $region31: #{pam_forward.1} parent=23 // pred_region
        %p214 = scmp.lt.s32.totalorder %s18, 1
        %s215 = scalar_select %p214, %s18, 1
        %s216 = smul.addr %s215, 8
        %s217 = smul.addr %s216, 8
        %s218 = scalar_lea.vmem %s1, %s217
      $region32: #{pam_forward.1} parent=23 // pred_fallthru
        _
      // Predicated region
      $region33: #{pam_forward.1} parent=23 // pred_check
        %p219 = pneg %p97
      $region34: #{pam_forward.1} parent=23 // pred_check_branch
        %221 = sbr.rel (%p219) target = $region36
      $region35: #{pam_forward.1} parent=23 // pred_region
        %p222 = scmp.lt.s32.totalorder %s18, 1
        %s223 = scalar_select %p222, %s18, 1
        %s224 = smul.addr %s223, 16
        %s225 = smul.addr %s224, 8
        %s226 = scalar_lea.vmem %s2, %s225
      $region36: #{pam_forward.1} parent=23 // pred_fallthru
        _
    $region24: #{pam_forward.1} parent=5 // pred_fallthru
      _
    %p227 = scmp.le.s32.totalorder 1, %s11
    %p228 = scmp.lt.s32.totalorder %s11, 3
    %p229 = pnand %p227, %p228
    %p230 = pneg %p229
    // Predicated region
    $region37: #{pam_forward.1} parent=5 // pred_check
      _
    $region38: #{pam_forward.1} parent=5 // pred_check_branch
      %232 = sbr.rel (%p229) target = $region40
    $region39: #{pam_forward.1} parent=5 // pred_region
      %s233 = ssub.s32 %s11, 1
      %s234 = smul.u32 32, %s21
      %p235 = scmp.lt.s32.totalorder %s20, 1
      %s236 = scalar_select %p235, %s20, 1
      %p237 = scmp.lt.s32.totalorder %s234, 31
      %s238 = scalar_select %p237, %s234, 31
      %s239 = smul.addr %s236, 32
      %s240 = sadd.s32 %s238, %s239
      %s241 = smul.addr %s240, 8
      %s242 = scalar_lea.vmem %s0, %s241
      %p243 = pneg %p51
      %p244 = pneg %p48
      %p245 = scmp.lt.s32.totalorder %s20, 1
      %s246 = scalar_select %p245, %s20, 1
      %s247 = smul.addr %s246, 8
      %s248 = smul.addr %s247, 8
      %s249 = scalar_lea.vmem %s1, %s248
      %p250 = pneg %p77
      %p251 = pneg %p74
      %p252 = scmp.lt.s32.totalorder %s20, 1
      %s253 = scalar_select %p252, %s20, 1
      %s254 = smul.addr %s253, 16
      %s255 = smul.addr %s254, 8
      %s256 = scalar_lea.vmem %s2, %s255
      %p257 = pneg %p103
      %p258 = pneg %p100
      %p259 = pneg %p124
      %p260 = pneg %p121
      %p261 = pneg %p145
      %p262 = pneg %p142
      %p263 = pneg %p173
      %p264 = pneg %p170
      %s265 = smul.u32 32, %s21
      %p266 = scmp.lt.s32.totalorder %s20, 1
      %s267 = scalar_select %p266, %s20, 1
      %p268 = scmp.lt.s32.totalorder %s265, 31
      %s269 = scalar_select %p268, %s265, 31
      %s270 = smul.addr %s267, 32
      %s271 = sadd.s32 %s269, %s270
      %s272 = smul.addr %s271, 8
      %s273 = scalar_lea.vmem %s5, %s272
      %s274 = smul.u32 32, %s21
      %p275 = scmp.lt.s32.totalorder %s20, 1
      %s276 = scalar_select %p275, %s20, 1
      %p277 = scmp.lt.s32.totalorder %s274, 31
      %s278 = scalar_select %p277, %s274, 31
      %s279 = smul.addr %s276, 32
      %s280 = sadd.s32 %s278, %s279
      %s281 = smul.addr %s280, 8
      %s282 = scalar_lea.vmem %s0, %s281
      %s283 = smul.u32 32, %s21
      %p284 = scmp.lt.s32.totalorder %s20, 1
      %s285 = scalar_select %p284, %s20, 1
      %s286 = smul.addr %s285, 8
      %s287 = smul.addr %s286, 8
      %s288 = scalar_lea.vmem %s1, %s287
      %p289 = scmp.lt.s32.totalorder %s20, 1
      %s290 = scalar_select %p289, %s20, 1
      %s291 = smul.addr %s290, 16
      %s292 = smul.addr %s291, 8
      %s293 = scalar_lea.vmem %s2, %s292
      %s294 = smul.u32 32, %s21
      %p295 = scmp.lt.s32.totalorder %s20, 1
      %s296 = scalar_select %p295, %s20, 1
      %p297 = scmp.lt.s32.totalorder %s294, 31
      %s298 = scalar_select %p297, %s294, 31
      %s299 = smul.addr %s296, 32
      %s300 = sadd.s32 %s298, %s299
      %s301 = smul.addr %s300, 8
      %s302 = scalar_lea.vmem %s5, %s301
      %s303 = smul.u32 32, %s21
      %v304 = vld [vmem:[%s282] sm:$0xff]
      %v305 = vld [vmem:[%s282 + $0x8] sm:$0xff]
      %v306 = vld [vmem:[%s282 + $0x10] sm:$0xff]
      %v307 = vld [vmem:[%s282 + $0x18] sm:$0xff]
      %v308 = vld [vmem:[%s282 + $0x20] sm:$0xff]
      %v309 = vld [vmem:[%s282 + $0x28] sm:$0xff]
      %v310 = vld [vmem:[%s282 + $0x30] sm:$0xff]
      %v311 = vld [vmem:[%s282 + $0x38] sm:$0xff]
      %v312 = vld [vmem:[%s282 + $0x40] sm:$0xff]
      %v313 = vld [vmem:[%s282 + $0x48] sm:$0xff]
      %v314 = vld [vmem:[%s282 + $0x50] sm:$0xff]
      %v315 = vld [vmem:[%s282 + $0x58] sm:$0xff]
      %v316 = vld [vmem:[%s282 + $0x60] sm:$0xff]
      %v317 = vld [vmem:[%s282 + $0x68] sm:$0xff]
      %v318 = vld [vmem:[%s282 + $0x70] sm:$0xff]
      %v319 = vld [vmem:[%s282 + $0x78] sm:$0xff]
      %v320 = vld [vmem:[%s282 + $0x80] sm:$0xff]
      %v321 = vld [vmem:[%s282 + $0x88] sm:$0xff]
      %v322 = vld [vmem:[%s282 + $0x90] sm:$0xff]
      %v323 = vld [vmem:[%s282 + $0x98] sm:$0xff]
      %v324 = vld [vmem:[%s282 + $0xa0] sm:$0xff]
      %v325 = vld [vmem:[%s282 + $0xa8] sm:$0xff]
      %v326 = vld [vmem:[%s282 + $0xb0] sm:$0xff]
      %v327 = vld [vmem:[%s282 + $0xb8] sm:$0xff]
      %v328 = vld [vmem:[%s282 + $0xc0] sm:$0xff]
      %v329 = vld [vmem:[%s282 + $0xc8] sm:$0xff]
      %v330 = vld [vmem:[%s282 + $0xd0] sm:$0xff]
      %v331 = vld [vmem:[%s282 + $0xd8] sm:$0xff]
      %v332 = vld [vmem:[%s282 + $0xe0] sm:$0xff]
      %v333 = vld [vmem:[%s282 + $0xe8] sm:$0xff]
      %v334 = vld [vmem:[%s282 + $0xf0] sm:$0xff]
      %v335 = vld [vmem:[%s282 + $0xf8] sm:$0xff]
      %v336 = vld [vmem:[%s288] sm:$0xff]
      %v337 = vld [vmem:[%s288 + $0x8] sm:$0xff]
      %v338 = vld [vmem:[%s288 + $0x10] sm:$0xff]
      %v339 = vld [vmem:[%s288 + $0x18] sm:$0xff]
      %v340 = vld [vmem:[%s288 + $0x20] sm:$0xff]
      %v341 = vld [vmem:[%s288 + $0x28] sm:$0xff]
      %v342 = vld [vmem:[%s288 + $0x30] sm:$0xff]
      %v343 = vld [vmem:[%s288 + $0x38] sm:$0xff]
      %v344 = vld [vmem:[%s293] sm:$0xff]
      %v345 = vld [vmem:[%s293 + $0x8] sm:$0xff]
      %v346 = vld [vmem:[%s293 + $0x10] sm:$0xff]
      %v347 = vld [vmem:[%s293 + $0x18] sm:$0xff]
      %v348 = vld [vmem:[%s293 + $0x20] sm:$0xff]
      %v349 = vld [vmem:[%s293 + $0x28] sm:$0xff]
      %v350 = vld [vmem:[%s293 + $0x30] sm:$0xff]
      %v351 = vld [vmem:[%s293 + $0x38] sm:$0xff]
      %v352 = vld [vmem:[%s293 + $0x40] sm:$0xff]
      %v353 = vld [vmem:[%s293 + $0x48] sm:$0xff]
      %v354 = vld [vmem:[%s293 + $0x50] sm:$0xff]
      %v355 = vld [vmem:[%s293 + $0x58] sm:$0xff]
      %v356 = vld [vmem:[%s293 + $0x60] sm:$0xff]
      %v357 = vld [vmem:[%s293 + $0x68] sm:$0xff]
      %v358 = vld [vmem:[%s293 + $0x70] sm:$0xff]
      %v359 = vld [vmem:[%s293 + $0x78] sm:$0xff]
      %v360 = vld [vmem:[%s3] sm:$0xff]
      %v361 = vld [vmem:[%s3 + $0x8] sm:$0xff]
      %v362 = vld [vmem:[%s3 + $0x10] sm:$0xff]
      %v363 = vld [vmem:[%s3 + $0x18] sm:$0xff]
      %v364 = vld [vmem:[%s3 + $0x20] sm:$0xff]
      %v365 = vld [vmem:[%s3 + $0x28] sm:$0xff]
      %v366 = vld [vmem:[%s3 + $0x30] sm:$0xff]
      %v367 = vld [vmem:[%s3 + $0x38] sm:$0xff]
      %v368 = vld [vmem:[%s3 + $0x40] sm:$0xff]
      %v369 = vld [vmem:[%s3 + $0x48] sm:$0xff]
      %v370 = vld [vmem:[%s3 + $0x50] sm:$0xff]
      %v371 = vld [vmem:[%s3 + $0x58] sm:$0xff]
      %v372 = vld [vmem:[%s3 + $0x60] sm:$0xff]
      %v373 = vld [vmem:[%s3 + $0x68] sm:$0xff]
      %v374 = vld [vmem:[%s3 + $0x70] sm:$0xff]
      %v375 = vld [vmem:[%s3 + $0x78] sm:$0xff]
      %v376 = vld [vmem:[%s4] sm:$0x1]
      %v378 = vlaneseq
      %v379 = vshrl.u32 %v378, 7
      %v380 = vsub.s32 0, %v379
      %v381 = vrot.slane %v376, %v380
      %383 = vmatprep.subr.mxu0 0.0
      %384 = vmatpush1.msra.mxu0 %v360
      %385 = vmatprep.subr.mxu0 0.0
      %386 = vmatpush1.msra.mxu0 %v361
      %387 = vmatprep.subr.mxu0 0.0
      %388 = vmatpush1.msra.mxu0 %v362
      %389 = vmatprep.subr.mxu0 0.0
      %390 = vmatpush1.msra.mxu0 %v363
      %391 = vmatprep.subr.mxu0 0.0
      %392 = vmatpush1.msra.mxu0 %v364
      %393 = vmatprep.subr.mxu0 0.0
      %394 = vmatpush1.msra.mxu0 %v365
      %395 = vmatprep.subr.mxu0 0.0
      %396 = vmatpush1.msra.mxu0 %v366
      %397 = vmatprep.subr.mxu0 0.0
      %398 = vmatpush1.msra.mxu0 %v367
      %399 = vmatprep.subr.mxu0 0.0
      %400 = vmatpush1.msra.mxu0 %v368
      %401 = vmatprep.subr.mxu0 0.0
      %402 = vmatpush1.msra.mxu0 %v369
      %403 = vmatprep.subr.mxu0 0.0
      %404 = vmatpush1.msra.mxu0 %v370
      %405 = vmatprep.subr.mxu0 0.0
      %406 = vmatpush1.msra.mxu0 %v371
      %407 = vmatprep.subr.mxu0 0.0
      %408 = vmatpush1.msra.mxu0 %v372
      %409 = vmatprep.subr.mxu0 0.0
      %410 = vmatpush1.msra.mxu0 %v373
      %411 = vmatprep.subr.mxu0 0.0
      %412 = vmatpush1.msra.mxu0 %v374
      %413 = vmatprep.subr.mxu0 0.0
      %414 = vmatpush1.msra.mxu0 %v375
      %415 = vmatprep.subr.mxu0 0.0
      %416 = vmatpush1.msra.mxu0 0.0
      %417 = vmatprep.subr.mxu0 0.0
      %418 = vmatpush1.msra.mxu0 0.0
      %419 = vmatprep.subr.mxu0 0.0
      %420 = vmatpush1.msra.mxu0 0.0
      %421 = vmatprep.subr.mxu0 0.0
      %422 = vmatpush1.msra.mxu0 0.0
      %423 = vmatprep.subr.mxu0 0.0
      %424 = vmatpush1.msra.mxu0 0.0
      %425 = vmatprep.subr.mxu0 0.0
      %426 = vmatpush1.msra.mxu0 0.0
      %427 = vmatprep.subr.mxu0 0.0
      %428 = vmatpush1.msra.mxu0 0.0
      %429 = vmatprep.subr.mxu0 0.0
      %430 = vmatpush1.msra.mxu0 0.0
      %431 = vmatprep.subr.mxu0 0.0
      %432 = vmatpush1.msra.mxu0 0.0
      %433 = vmatprep.subr.mxu0 0.0
      %434 = vmatpush1.msra.mxu0 0.0
      %435 = vmatprep.subr.mxu0 0.0
      %436 = vmatpush1.msra.mxu0 0.0
      %437 = vmatprep.subr.mxu0 0.0
      %438 = vmatpush1.msra.mxu0 0.0
      %439 = vmatprep.subr.mxu0 0.0
      %440 = vmatpush1.msra.mxu0 0.0
      %441 = vmatprep.subr.mxu0 0.0
      %442 = vmatpush1.msra.mxu0 0.0
      %443 = vmatprep.subr.mxu0 0.0
      %444 = vmatpush1.msra.mxu0 0.0
      %445 = vmatprep.subr.mxu0 0.0
      %446 = vmatpush1.msra.mxu0 0.0
      %447 = vmatprep.mubr.f32.mxu0 0.0
      %448 = vmatmul.mubr.f32.gmra.mrb[0].mxu0 %v304
      %v449 = vpop.f32.mrb[0].mxu0
      %v450 = vadd.f32 %v381, %v449
      %v451 = vpop.f32.mrb[0].mxu0
      %452 = vmatprep.mubr.f32.mxu0 0.0
      %453 = vmatmul.mubr.f32.gmra.mrb[0].mxu0 %v305
      %v454 = vpop.f32.mrb[0].mxu0
      %v455 = vadd.f32 %v381, %v454
      %v456 = vpop.f32.mrb[0].mxu0
      %457 = vmatprep.mubr.f32.mxu0 0.0
      %458 = vmatmul.mubr.f32.gmra.mrb[0].mxu0 %v306
      %v459 = vpop.f32.mrb[0].mxu0
      %v460 = vadd.f32 %v381, %v459
      %v461 = vpop.f32.mrb[0].mxu0
      %462 = vmatprep.mubr.f32.mxu0 0.0
      %463 = vmatmul.mubr.f32.gmra.mrb[0].mxu0 %v307
      %v464 = vpop.f32.mrb[0].mxu0
      %v465 = vadd.f32 %v381, %v464
      %v466 = vpop.f32.mrb[0].mxu0
      %467 = vmatprep.mubr.f32.mxu0 0.0
      %468 = vmatmul.mubr.f32.gmra.mrb[0].mxu0 %v308
      %v469 = vpop.f32.mrb[0].mxu0
      %v470 = vadd.f32 %v381, %v469
      %v471 = vpop.f32.mrb[0].mxu0
      %472 = vmatprep.mubr.f32.mxu0 0.0
      %473 = vmatmul.mubr.f32.gmra.mrb[0].mxu0 %v309
      %v474 = vpop.f32.mrb[0].mxu0
      %v475 = vadd.f32 %v381, %v474
      %v476 = vpop.f32.mrb[0].mxu0
      %477 = vmatprep.mubr.f32.mxu0 0.0
      %478 = vmatmul.mubr.f32.gmra.mrb[0].mxu0 %v310
      %v479 = vpop.f32.mrb[0].mxu0
      %v480 = vadd.f32 %v381, %v479
      %v481 = vpop.f32.mrb[0].mxu0
      %482 = vmatprep.mubr.f32.mxu0 0.0
      %483 = vmatmul.mubr.f32.gmra.mrb[0].mxu0 %v311
      %v484 = vpop.f32.mrb[0].mxu0
      %v485 = vadd.f32 %v381, %v484
      %v486 = vpop.f32.mrb[0].mxu0
      %487 = vmatprep.mubr.f32.mxu0 0.0
      %488 = vmatmul.mubr.f32.gmra.mrb[0].mxu0 %v312
      %v489 = vpop.f32.mrb[0].mxu0
      %v490 = vadd.f32 %v381, %v489
      %v491 = vpop.f32.mrb[0].mxu0
      %492 = vmatprep.mubr.f32.mxu0 0.0
      %493 = vmatmul.mubr.f32.gmra.mrb[0].mxu0 %v313
      %v494 = vpop.f32.mrb[0].mxu0
      %v495 = vadd.f32 %v381, %v494
      %v496 = vpop.f32.mrb[0].mxu0
      %497 = vmatprep.mubr.f32.mxu0 0.0
      %498 = vmatmul.mubr.f32.gmra.mrb[0].mxu0 %v314
      %v499 = vpop.f32.mrb[0].mxu0
      %v500 = vadd.f32 %v381, %v499
      %v501 = vpop.f32.mrb[0].mxu0
      %502 = vmatprep.mubr.f32.mxu0 0.0
      %503 = vmatmul.mubr.f32.gmra.mrb[0].mxu0 %v315
      %v504 = vpop.f32.mrb[0].mxu0
      %v505 = vadd.f32 %v381, %v504
      %v506 = vpop.f32.mrb[0].mxu0
      %507 = vmatprep.mubr.f32.mxu0 0.0
      %508 = vmatmul.mubr.f32.gmra.mrb[0].mxu0 %v316
      %v509 = vpop.f32.mrb[0].mxu0
      %v510 = vadd.f32 %v381, %v509
      %v511 = vpop.f32.mrb[0].mxu0
      %512 = vmatprep.mubr.f32.mxu0 0.0
      %513 = vmatmul.mubr.f32.gmra.mrb[0].mxu0 %v317
      %v514 = vpop.f32.mrb[0].mxu0
      %v515 = vadd.f32 %v381, %v514
      %v516 = vpop.f32.mrb[0].mxu0
      %517 = vmatprep.mubr.f32.mxu0 0.0
      %518 = vmatmul.mubr.f32.gmra.mrb[0].mxu0 %v318
      %v519 = vpop.f32.mrb[0].mxu0
      %v520 = vadd.f32 %v381, %v519
      %v521 = vpop.f32.mrb[0].mxu0
      %522 = vmatprep.mubr.f32.mxu0 0.0
      %523 = vmatmul.mubr.f32.gmra.mrb[0].mxu0 %v319
      %v524 = vpop.f32.mrb[0].mxu0
      %v525 = vadd.f32 %v381, %v524
      %v526 = vpop.f32.mrb[0].mxu0
      %527 = vmatprep.mubr.f32.mxu0 0.0
      %528 = vmatmul.mubr.f32.gmra.mrb[0].mxu0 %v320
      %v529 = vpop.f32.mrb[0].mxu0
      %v530 = vadd.f32 %v381, %v529
      %v531 = vpop.f32.mrb[0].mxu0
      %532 = vmatprep.mubr.f32.mxu0 0.0
      %533 = vmatmul.mubr.f32.gmra.mrb[0].mxu0 %v321
      %v534 = vpop.f32.mrb[0].mxu0
      %v535 = vadd.f32 %v381, %v534
      %v536 = vpop.f32.mrb[0].mxu0
      %537 = vmatprep.mubr.f32.mxu0 0.0
      %538 = vmatmul.mubr.f32.gmra.mrb[0].mxu0 %v322
      %v539 = vpop.f32.mrb[0].mxu0
      %v540 = vadd.f32 %v381, %v539
      %v541 = vpop.f32.mrb[0].mxu0
      %542 = vmatprep.mubr.f32.mxu0 0.0
      %543 = vmatmul.mubr.f32.gmra.mrb[0].mxu0 %v323
      %v544 = vpop.f32.mrb[0].mxu0
      %v545 = vadd.f32 %v381, %v544
      %v546 = vpop.f32.mrb[0].mxu0
      %547 = vmatprep.mubr.f32.mxu0 0.0
      %548 = vmatmul.mubr.f32.gmra.mrb[0].mxu0 %v324
      %v549 = vpop.f32.mrb[0].mxu0
      %v550 = vadd.f32 %v381, %v549
      %v551 = vpop.f32.mrb[0].mxu0
      %552 = vmatprep.mubr.f32.mxu0 0.0
      %553 = vmatmul.mubr.f32.gmra.mrb[0].mxu0 %v325
      %v554 = vpop.f32.mrb[0].mxu0
      %v555 = vadd.f32 %v381, %v554
      %v556 = vpop.f32.mrb[0].mxu0
      %557 = vmatprep.mubr.f32.mxu0 0.0
      %558 = vmatmul.mubr.f32.gmra.mrb[0].mxu0 %v326
      %v559 = vpop.f32.mrb[0].mxu0
      %v560 = vadd.f32 %v381, %v559
      %v561 = vpop.f32.mrb[0].mxu0
      %562 = vmatprep.mubr.f32.mxu0 0.0
      %563 = vmatmul.mubr.f32.gmra.mrb[0].mxu0 %v327
      %v564 = vpop.f32.mrb[0].mxu0
      %v565 = vadd.f32 %v381, %v564
      %v566 = vpop.f32.mrb[0].mxu0
      %567 = vmatprep.mubr.f32.mxu0 0.0
      %568 = vmatmul.mubr.f32.gmra.mrb[0].mxu0 %v328
      %v569 = vpop.f32.mrb[0].mxu0
      %v570 = vadd.f32 %v381, %v569
      %v571 = vpop.f32.mrb[0].mxu0
      %572 = vmatprep.mubr.f32.mxu0 0.0
      %573 = vmatmul.mubr.f32.gmra.mrb[0].mxu0 %v329
      %v574 = vpop.f32.mrb[0].mxu0
      %v575 = vadd.f32 %v381, %v574
      %v576 = vpop.f32.mrb[0].mxu0
      %577 = vmatprep.mubr.f32.mxu0 0.0
      %578 = vmatmul.mubr.f32.gmra.mrb[0].mxu0 %v330
      %v579 = vpop.f32.mrb[0].mxu0
      %v580 = vadd.f32 %v381, %v579
      %v581 = vpop.f32.mrb[0].mxu0
      %582 = vmatprep.mubr.f32.mxu0 0.0
      %583 = vmatmul.mubr.f32.gmra.mrb[0].mxu0 %v331
      %v584 = vpop.f32.mrb[0].mxu0
      %v585 = vadd.f32 %v381, %v584
      %v586 = vpop.f32.mrb[0].mxu0
      %587 = vmatprep.mubr.f32.mxu0 0.0
      %588 = vmatmul.mubr.f32.gmra.mrb[0].mxu0 %v332
      %v589 = vpop.f32.mrb[0].mxu0
      %v590 = vadd.f32 %v381, %v589
      %v591 = vpop.f32.mrb[0].mxu0
      %592 = vmatprep.mubr.f32.mxu0 0.0
      %593 = vmatmul.mubr.f32.gmra.mrb[0].mxu0 %v333
      %v594 = vpop.f32.mrb[0].mxu0
      %v595 = vadd.f32 %v381, %v594
      %v596 = vpop.f32.mrb[0].mxu0
      %597 = vmatprep.mubr.f32.mxu0 0.0
      %598 = vmatmul.mubr.f32.gmra.mrb[0].mxu0 %v334
      %v599 = vpop.f32.mrb[0].mxu0
      %v600 = vadd.f32 %v381, %v599
      %v601 = vpop.f32.mrb[0].mxu0
      %602 = vmatprep.mubr.f32.mxu0 0.0
      %603 = vmatmul.mubr.f32.gmra.mrb[0].mxu0 %v335
      %v604 = vpop.f32.mrb[0].mxu0
      %v605 = vadd.f32 %v381, %v604
      %v606 = vpop.f32.mrb[0].mxu0
      %607 = vdwg.mxu0
      %608 = vmatprep.subr.mxu0 0.0
      %609 = vmatpush1.msra.mxu0 %v344
      %610 = vmatprep.subr.mxu0 0.0
      %611 = vmatpush1.msra.mxu0 %v345
      %612 = vmatprep.subr.mxu0 0.0
      %613 = vmatpush1.msra.mxu0 %v346
      %614 = vmatprep.subr.mxu0 0.0
      %615 = vmatpush1.msra.mxu0 %v347
      %616 = vmatprep.subr.mxu0 0.0
      %617 = vmatpush1.msra.mxu0 %v348
      %618 = vmatprep.subr.mxu0 0.0
      %619 = vmatpush1.msra.mxu0 %v349
      %620 = vmatprep.subr.mxu0 0.0
      %621 = vmatpush1.msra.mxu0 %v350
      %622 = vmatprep.subr.mxu0 0.0
      %623 = vmatpush1.msra.mxu0 %v351
      %624 = vmatprep.subr.mxu0 0.0
      %625 = vmatpush1.msra.mxu0 %v352
      %626 = vmatprep.subr.mxu0 0.0
      %627 = vmatpush1.msra.mxu0 %v353
      %628 = vmatprep.subr.mxu0 0.0
      %629 = vmatpush1.msra.mxu0 %v354
      %630 = vmatprep.subr.mxu0 0.0
      %631 = vmatpush1.msra.mxu0 %v355
      %632 = vmatprep.subr.mxu0 0.0
      %633 = vmatpush1.msra.mxu0 %v356
      %634 = vmatprep.subr.mxu0 0.0
      %635 = vmatpush1.msra.mxu0 %v357
      %636 = vmatprep.subr.mxu0 0.0
      %637 = vmatpush1.msra.mxu0 %v358
      %638 = vmatprep.subr.mxu0 0.0
      %639 = vmatpush1.msra.mxu0 %v359
      %640 = vmatprep.subr.mxu0 0.0
      %641 = vmatpush1.msra.mxu0 0.0
      %642 = vmatprep.subr.mxu0 0.0
      %643 = vmatpush1.msra.mxu0 0.0
      %644 = vmatprep.subr.mxu0 0.0
      %645 = vmatpush1.msra.mxu0 0.0
      %646 = vmatprep.subr.mxu0 0.0
      %647 = vmatpush1.msra.mxu0 0.0
      %648 = vmatprep.subr.mxu0 0.0
      %649 = vmatpush1.msra.mxu0 0.0
      %650 = vmatprep.subr.mxu0 0.0
      %651 = vmatpush1.msra.mxu0 0.0
      %652 = vmatprep.subr.mxu0 0.0
      %653 = vmatpush1.msra.mxu0 0.0
      %654 = vmatprep.subr.mxu0 0.0
      %655 = vmatpush1.msra.mxu0 0.0
      %656 = vmatprep.subr.mxu0 0.0
      %657 = vmatpush1.msra.mxu0 0.0
      %658 = vmatprep.subr.mxu0 0.0
      %659 = vmatpush1.msra.mxu0 0.0
      %660 = vmatprep.subr.mxu0 0.0
      %661 = vmatpush1.msra.mxu0 0.0
      %662 = vmatprep.subr.mxu0 0.0
      %663 = vmatpush1.msra.mxu0 0.0
      %664 = vmatprep.subr.mxu0 0.0
      %665 = vmatpush1.msra.mxu0 0.0
      %666 = vmatprep.subr.mxu0 0.0
      %667 = vmatpush1.msra.mxu0 0.0
      %668 = vmatprep.subr.mxu0 0.0
      %669 = vmatpush1.msra.mxu0 0.0
      %670 = vmatprep.subr.mxu0 0.0
      %671 = vmatpush1.msra.mxu0 0.0
      %672 = vmatprep.mubr.f32.mxu0 0.0
      %673 = vmatmul.mubr.f32.gmra.mrb[0].mxu0 %v450
      %v674 = vpop.f32.mrb[0].mxu0
      %v675 = vadd.f32 0.0, %v674
      %v676 = vpop.f32.mrb[0].mxu0
      %677 = vmatprep.mubr.f32.mxu0 0.0
      %678 = vmatmul.mubr.f32.gmra.mrb[0].mxu0 %v455
      %v679 = vpop.f32.mrb[0].mxu0
      %v680 = vadd.f32 0.0, %v679
      %v681 = vpop.f32.mrb[0].mxu0
      %682 = vmatprep.mubr.f32.mxu0 0.0
      %683 = vmatmul.mubr.f32.gmra.mrb[0].mxu0 %v460
      %v684 = vpop.f32.mrb[0].mxu0
      %v685 = vadd.f32 0.0, %v684
      %v686 = vpop.f32.mrb[0].mxu0
      %687 = vmatprep.mubr.f32.mxu0 0.0
      %688 = vmatmul.mubr.f32.gmra.mrb[0].mxu0 %v465
      %v689 = vpop.f32.mrb[0].mxu0
      %v690 = vadd.f32 0.0, %v689
      %v691 = vpop.f32.mrb[0].mxu0
      %692 = vmatprep.mubr.f32.mxu0 0.0
      %693 = vmatmul.mubr.f32.gmra.mrb[0].mxu0 %v470
      %v694 = vpop.f32.mrb[0].mxu0
      %v695 = vadd.f32 0.0, %v694
      %v696 = vpop.f32.mrb[0].mxu0
      %697 = vmatprep.mubr.f32.mxu0 0.0
      %698 = vmatmul.mubr.f32.gmra.mrb[0].mxu0 %v475
      %v699 = vpop.f32.mrb[0].mxu0
      %v700 = vadd.f32 0.0, %v699
      %v701 = vpop.f32.mrb[0].mxu0
      %702 = vmatprep.mubr.f32.mxu0 0.0
      %703 = vmatmul.mubr.f32.gmra.mrb[0].mxu0 %v480
      %v704 = vpop.f32.mrb[0].mxu0
      %v705 = vadd.f32 0.0, %v704
      %v706 = vpop.f32.mrb[0].mxu0
      %707 = vmatprep.mubr.f32.mxu0 0.0
      %708 = vmatmul.mubr.f32.gmra.mrb[0].mxu0 %v485
      %v709 = vpop.f32.mrb[0].mxu0
      %v710 = vadd.f32 0.0, %v709
      %v711 = vpop.f32.mrb[0].mxu0
      %712 = vmatprep.mubr.f32.mxu0 0.0
      %713 = vmatmul.mubr.f32.gmra.mrb[0].mxu0 %v490
      %v714 = vpop.f32.mrb[0].mxu0
      %v715 = vadd.f32 0.0, %v714
      %v716 = vpop.f32.mrb[0].mxu0
      %717 = vmatprep.mubr.f32.mxu0 0.0
      %718 = vmatmul.mubr.f32.gmra.mrb[0].mxu0 %v495
      %v719 = vpop.f32.mrb[0].mxu0
      %v720 = vadd.f32 0.0, %v719
      %v721 = vpop.f32.mrb[0].mxu0
      %722 = vmatprep.mubr.f32.mxu0 0.0
      %723 = vmatmul.mubr.f32.gmra.mrb[0].mxu0 %v500
      %v724 = vpop.f32.mrb[0].mxu0
      %v725 = vadd.f32 0.0, %v724
      %v726 = vpop.f32.mrb[0].mxu0
      %727 = vmatprep.mubr.f32.mxu0 0.0
      %728 = vmatmul.mubr.f32.gmra.mrb[0].mxu0 %v505
      %v729 = vpop.f32.mrb[0].mxu0
      %v730 = vadd.f32 0.0, %v729
      %v731 = vpop.f32.mrb[0].mxu0
      %732 = vmatprep.mubr.f32.mxu0 0.0
      %733 = vmatmul.mubr.f32.gmra.mrb[0].mxu0 %v510
      %v734 = vpop.f32.mrb[0].mxu0
      %v735 = vadd.f32 0.0, %v734
      %v736 = vpop.f32.mrb[0].mxu0
      %737 = vmatprep.mubr.f32.mxu0 0.0
      %738 = vmatmul.mubr.f32.gmra.mrb[0].mxu0 %v515
      %v739 = vpop.f32.mrb[0].mxu0
      %v740 = vadd.f32 0.0, %v739
      %v741 = vpop.f32.mrb[0].mxu0
      %742 = vmatprep.mubr.f32.mxu0 0.0
      %743 = vmatmul.mubr.f32.gmra.mrb[0].mxu0 %v520
      %v744 = vpop.f32.mrb[0].mxu0
      %v745 = vadd.f32 0.0, %v744
      %v746 = vpop.f32.mrb[0].mxu0
      %747 = vmatprep.mubr.f32.mxu0 0.0
      %748 = vmatmul.mubr.f32.gmra.mrb[0].mxu0 %v525
      %v749 = vpop.f32.mrb[0].mxu0
      %v750 = vadd.f32 0.0, %v749
      %v751 = vpop.f32.mrb[0].mxu0
      %752 = vmatprep.mubr.f32.mxu0 0.0
      %753 = vmatmul.mubr.f32.gmra.mrb[0].mxu0 %v530
      %v754 = vpop.f32.mrb[0].mxu0
      %v755 = vadd.f32 0.0, %v754
      %v756 = vpop.f32.mrb[0].mxu0
      %757 = vmatprep.mubr.f32.mxu0 0.0
      %758 = vmatmul.mubr.f32.gmra.mrb[0].mxu0 %v535
      %v759 = vpop.f32.mrb[0].mxu0
      %v760 = vadd.f32 0.0, %v759
      %v761 = vpop.f32.mrb[0].mxu0
      %762 = vmatprep.mubr.f32.mxu0 0.0
      %763 = vmatmul.mubr.f32.gmra.mrb[0].mxu0 %v540
      %v764 = vpop.f32.mrb[0].mxu0
      %v765 = vadd.f32 0.0, %v764
      %v766 = vpop.f32.mrb[0].mxu0
      %767 = vmatprep.mubr.f32.mxu0 0.0
      %768 = vmatmul.mubr.f32.gmra.mrb[0].mxu0 %v545
      %v769 = vpop.f32.mrb[0].mxu0
      %v770 = vadd.f32 0.0, %v769
      %v771 = vpop.f32.mrb[0].mxu0
      %772 = vmatprep.mubr.f32.mxu0 0.0
      %773 = vmatmul.mubr.f32.gmra.mrb[0].mxu0 %v550
      %v774 = vpop.f32.mrb[0].mxu0
      %v775 = vadd.f32 0.0, %v774
      %v776 = vpop.f32.mrb[0].mxu0
      %777 = vmatprep.mubr.f32.mxu0 0.0
      %778 = vmatmul.mubr.f32.gmra.mrb[0].mxu0 %v555
      %v779 = vpop.f32.mrb[0].mxu0
      %v780 = vadd.f32 0.0, %v779
      %v781 = vpop.f32.mrb[0].mxu0
      %782 = vmatprep.mubr.f32.mxu0 0.0
      %783 = vmatmul.mubr.f32.gmra.mrb[0].mxu0 %v560
      %v784 = vpop.f32.mrb[0].mxu0
      %v785 = vadd.f32 0.0, %v784
      %v786 = vpop.f32.mrb[0].mxu0
      %787 = vmatprep.mubr.f32.mxu0 0.0
      %788 = vmatmul.mubr.f32.gmra.mrb[0].mxu0 %v565
      %v789 = vpop.f32.mrb[0].mxu0
      %v790 = vadd.f32 0.0, %v789
      %v791 = vpop.f32.mrb[0].mxu0
      %792 = vmatprep.mubr.f32.mxu0 0.0
      %793 = vmatmul.mubr.f32.gmra.mrb[0].mxu0 %v570
      %v794 = vpop.f32.mrb[0].mxu0
      %v795 = vadd.f32 0.0, %v794
      %v796 = vpop.f32.mrb[0].mxu0
      %797 = vmatprep.mubr.f32.mxu0 0.0
      %798 = vmatmul.mubr.f32.gmra.mrb[0].mxu0 %v575
      %v799 = vpop.f32.mrb[0].mxu0
      %v800 = vadd.f32 0.0, %v799
      %v801 = vpop.f32.mrb[0].mxu0
      %802 = vmatprep.mubr.f32.mxu0 0.0
      %803 = vmatmul.mubr.f32.gmra.mrb[0].mxu0 %v580
      %v804 = vpop.f32.mrb[0].mxu0
      %v805 = vadd.f32 0.0, %v804
      %v806 = vpop.f32.mrb[0].mxu0
      %807 = vmatprep.mubr.f32.mxu0 0.0
      %808 = vmatmul.mubr.f32.gmra.mrb[0].mxu0 %v585
      %v809 = vpop.f32.mrb[0].mxu0
      %v810 = vadd.f32 0.0, %v809
      %v811 = vpop.f32.mrb[0].mxu0
      %812 = vmatprep.mubr.f32.mxu0 0.0
      %813 = vmatmul.mubr.f32.gmra.mrb[0].mxu0 %v590
      %v814 = vpop.f32.mrb[0].mxu0
      %v815 = vadd.f32 0.0, %v814
      %v816 = vpop.f32.mrb[0].mxu0
      %817 = vmatprep.mubr.f32.mxu0 0.0
      %818 = vmatmul.mubr.f32.gmra.mrb[0].mxu0 %v595
      %v819 = vpop.f32.mrb[0].mxu0
      %v820 = vadd.f32 0.0, %v819
      %v821 = vpop.f32.mrb[0].mxu0
      %822 = vmatprep.mubr.f32.mxu0 0.0
      %823 = vmatmul.mubr.f32.gmra.mrb[0].mxu0 %v600
      %v824 = vpop.f32.mrb[0].mxu0
      %v825 = vadd.f32 0.0, %v824
      %v826 = vpop.f32.mrb[0].mxu0
      %827 = vmatprep.mubr.f32.mxu0 0.0
      %828 = vmatmul.mubr.f32.gmra.mrb[0].mxu0 %v605
      %v829 = vpop.f32.mrb[0].mxu0
      %v830 = vadd.f32 0.0, %v829
      %v831 = vpop.f32.mrb[0].mxu0
      %832 = vdwg.mxu0
      %vm833 = vcmask 523264
      %v834 = vsel %vm833, %v675, -inf
      %835 = vmax.xlane.f32.xlu0 %v834
      %v836 = vpop.xlane.xlu0 %835
      %v837 = vsel %vm833, %v680, -inf
      %838 = vmax.xlane.f32.xlu0 %v837
      %v839 = vpop.xlane.xlu0 %838
      %v840 = vsel %vm833, %v685, -inf
      %841 = vmax.xlane.f32.xlu0 %v840
      %v842 = vpop.xlane.xlu0 %841
      %v843 = vsel %vm833, %v690, -inf
      %844 = vmax.xlane.f32.xlu0 %v843
      %v845 = vpop.xlane.xlu0 %844
      %v846 = vsel %vm833, %v695, -inf
      %847 = vmax.xlane.f32.xlu0 %v846
      %v848 = vpop.xlane.xlu0 %847
      %v849 = vsel %vm833, %v700, -inf
      %850 = vmax.xlane.f32.xlu0 %v849
      %v851 = vpop.xlane.xlu0 %850
      %v852 = vsel %vm833, %v705, -inf
      %853 = vmax.xlane.f32.xlu0 %v852
      %v854 = vpop.xlane.xlu0 %853
      %v855 = vsel %vm833, %v710, -inf
      %856 = vmax.xlane.f32.xlu0 %v855
      %v857 = vpop.xlane.xlu0 %856
      %v858 = vsel %vm833, %v715, -inf
      %859 = vmax.xlane.f32.xlu0 %v858
      %v860 = vpop.xlane.xlu0 %859
      %v861 = vsel %vm833, %v720, -inf
      %862 = vmax.xlane.f32.xlu0 %v861
      %v863 = vpop.xlane.xlu0 %862
      %v864 = vsel %vm833, %v725, -inf
      %865 = vmax.xlane.f32.xlu0 %v864
      %v866 = vpop.xlane.xlu0 %865
      %v867 = vsel %vm833, %v730, -inf
      %868 = vmax.xlane.f32.xlu0 %v867
      %v869 = vpop.xlane.xlu0 %868
      %v870 = vsel %vm833, %v735, -inf
      %871 = vmax.xlane.f32.xlu0 %v870
      %v872 = vpop.xlane.xlu0 %871
      %v873 = vsel %vm833, %v740, -inf
      %874 = vmax.xlane.f32.xlu0 %v873
      %v875 = vpop.xlane.xlu0 %874
      %v876 = vsel %vm833, %v745, -inf
      %877 = vmax.xlane.f32.xlu0 %v876
      %v878 = vpop.xlane.xlu0 %877
      %v879 = vsel %vm833, %v750, -inf
      %880 = vmax.xlane.f32.xlu0 %v879
      %v881 = vpop.xlane.xlu0 %880
      %v882 = vsel %vm833, %v755, -inf
      %883 = vmax.xlane.f32.xlu0 %v882
      %v884 = vpop.xlane.xlu0 %883
      %v885 = vsel %vm833, %v760, -inf
      %886 = vmax.xlane.f32.xlu0 %v885
      %v887 = vpop.xlane.xlu0 %886
      %v888 = vsel %vm833, %v765, -inf
      %889 = vmax.xlane.f32.xlu0 %v888
      %v890 = vpop.xlane.xlu0 %889
      %v891 = vsel %vm833, %v770, -inf
      %892 = vmax.xlane.f32.xlu0 %v891
      %v893 = vpop.xlane.xlu0 %892
      %v894 = vsel %vm833, %v775, -inf
      %895 = vmax.xlane.f32.xlu0 %v894
      %v896 = vpop.xlane.xlu0 %895
      %v897 = vsel %vm833, %v780, -inf
      %898 = vmax.xlane.f32.xlu0 %v897
      %v899 = vpop.xlane.xlu0 %898
      %v900 = vsel %vm833, %v785, -inf
      %901 = vmax.xlane.f32.xlu0 %v900
      %v902 = vpop.xlane.xlu0 %901
      %v903 = vsel %vm833, %v790, -inf
      %904 = vmax.xlane.f32.xlu0 %v903
      %v905 = vpop.xlane.xlu0 %904
      %v906 = vsel %vm833, %v795, -inf
      %907 = vmax.xlane.f32.xlu0 %v906
      %v908 = vpop.xlane.xlu0 %907
      %v909 = vsel %vm833, %v800, -inf
      %910 = vmax.xlane.f32.xlu0 %v909
      %v911 = vpop.xlane.xlu0 %910
      %v912 = vsel %vm833, %v805, -inf
      %913 = vmax.xlane.f32.xlu0 %v912
      %v914 = vpop.xlane.xlu0 %913
      %v915 = vsel %vm833, %v810, -inf
      %916 = vmax.xlane.f32.xlu0 %v915
      %v917 = vpop.xlane.xlu0 %916
      %v918 = vsel %vm833, %v815, -inf
      %919 = vmax.xlane.f32.xlu0 %v918
      %v920 = vpop.xlane.xlu0 %919
      %v921 = vsel %vm833, %v820, -inf
      %922 = vmax.xlane.f32.xlu0 %v921
      %v923 = vpop.xlane.xlu0 %922
      %v924 = vsel %vm833, %v825, -inf
      %925 = vmax.xlane.f32.xlu0 %v924
      %v926 = vpop.xlane.xlu0 %925
      %v927 = vsel %vm833, %v830, -inf
      %928 = vmax.xlane.f32.xlu0 %v927
      %v929 = vpop.xlane.xlu0 %928
      %v930 = vsub.f32 %v675, %v836
      %v931 = vsub.f32 %v680, %v839
      %v932 = vsub.f32 %v685, %v842
      %v933 = vsub.f32 %v690, %v845
      %v934 = vsub.f32 %v695, %v848
      %v935 = vsub.f32 %v700, %v851
      %v936 = vsub.f32 %v705, %v854
      %v937 = vsub.f32 %v710, %v857
      %v938 = vsub.f32 %v715, %v860
      %v939 = vsub.f32 %v720, %v863
      %v940 = vsub.f32 %v725, %v866
      %v941 = vsub.f32 %v730, %v869
      %v942 = vsub.f32 %v735, %v872
      %v943 = vsub.f32 %v740, %v875
      %v944 = vsub.f32 %v745, %v878
      %v945 = vsub.f32 %v750, %v881
      %v946 = vsub.f32 %v755, %v884
      %v947 = vsub.f32 %v760, %v887
      %v948 = vsub.f32 %v765, %v890
      %v949 = vsub.f32 %v770, %v893
      %v950 = vsub.f32 %v775, %v896
      %v951 = vsub.f32 %v780, %v899
      %v952 = vsub.f32 %v785, %v902
      %v953 = vsub.f32 %v790, %v905
      %v954 = vsub.f32 %v795, %v908
      %v955 = vsub.f32 %v800, %v911
      %v956 = vsub.f32 %v805, %v914
      %v957 = vsub.f32 %v810, %v917
      %v958 = vsub.f32 %v815, %v920
      %v959 = vsub.f32 %v820, %v923
      %v960 = vsub.f32 %v825, %v926
      %v961 = vsub.f32 %v830, %v929
      %v962 = vmul.f32 %v930, 1.442695
      %v963 = vpow.pop %v962
      %v964 = vmul.f32 %v931, 1.442695
      %v965 = vpow.pop %v964
      %v966 = vmul.f32 %v932, 1.442695
      %v967 = vpow.pop %v966
      %v968 = vmul.f32 %v933, 1.442695
      %v969 = vpow.pop %v968
      %v970 = vmul.f32 %v934, 1.442695
      %v971 = vpow.pop %v970
      %v972 = vmul.f32 %v935, 1.442695
      %v973 = vpow.pop %v972
      %v974 = vmul.f32 %v936, 1.442695
      %v975 = vpow.pop %v974
      %v976 = vmul.f32 %v937, 1.442695
      %v977 = vpow.pop %v976
      %v978 = vmul.f32 %v938, 1.442695
      %v979 = vpow.pop %v978
      %v980 = vmul.f32 %v939, 1.442695
      %v981 = vpow.pop %v980
      %v982 = vmul.f32 %v940, 1.442695
      %v983 = vpow.pop %v982
      %v984 = vmul.f32 %v941, 1.442695
      %v985 = vpow.pop %v984
      %v986 = vmul.f32 %v942, 1.442695
      %v987 = vpow.pop %v986
      %v988 = vmul.f32 %v943, 1.442695
      %v989 = vpow.pop %v988
      %v990 = vmul.f32 %v944, 1.442695
      %v991 = vpow.pop %v990
      %v992 = vmul.f32 %v945, 1.442695
      %v993 = vpow.pop %v992
      %v994 = vmul.f32 %v946, 1.442695
      %v995 = vpow.pop %v994
      %v996 = vmul.f32 %v947, 1.442695
      %v997 = vpow.pop %v996
      %v998 = vmul.f32 %v948, 1.442695
      %v999 = vpow.pop %v998
      %v1000 = vmul.f32 %v949, 1.442695
      %v1001 = vpow.pop %v1000
      %v1002 = vmul.f32 %v950, 1.442695
      %v1003 = vpow.pop %v1002
      %v1004 = vmul.f32 %v951, 1.442695
      %v1005 = vpow.pop %v1004
      %v1006 = vmul.f32 %v952, 1.442695
      %v1007 = vpow.pop %v1006
      %v1008 = vmul.f32 %v953, 1.442695
      %v1009 = vpow.pop %v1008
      %v1010 = vmul.f32 %v954, 1.442695
      %v1011 = vpow.pop %v1010
      %v1012 = vmul.f32 %v955, 1.442695
      %v1013 = vpow.pop %v1012
      %v1014 = vmul.f32 %v956, 1.442695
      %v1015 = vpow.pop %v1014
      %v1016 = vmul.f32 %v957, 1.442695
      %v1017 = vpow.pop %v1016
      %v1018 = vmul.f32 %v958, 1.442695
      %v1019 = vpow.pop %v1018
      %v1020 = vmul.f32 %v959, 1.442695
      %v1021 = vpow.pop %v1020
      %v1022 = vmul.f32 %v960, 1.442695
      %v1023 = vpow.pop %v1022
      %v1024 = vmul.f32 %v961, 1.442695
      %v1025 = vpow.pop %v1024
      %v1026 = vsel %vm833, %v963, 0.0
      %1027 = vadd.xlane.f32.xlu0 %v1026
      %v1028 = vpop.xlane.xlu0 %1027
      %v1029 = vsel %vm833, %v965, 0.0
      %1030 = vadd.xlane.f32.xlu0 %v1029
      %v1031 = vpop.xlane.xlu0 %1030
      %v1032 = vsel %vm833, %v967, 0.0
      %1033 = vadd.xlane.f32.xlu0 %v1032
      %v1034 = vpop.xlane.xlu0 %1033
      %v1035 = vsel %vm833, %v969, 0.0
      %1036 = vadd.xlane.f32.xlu0 %v1035
      %v1037 = vpop.xlane.xlu0 %1036
      %v1038 = vsel %vm833, %v971, 0.0
      %1039 = vadd.xlane.f32.xlu0 %v1038
      %v1040 = vpop.xlane.xlu0 %1039
      %v1041 = vsel %vm833, %v973, 0.0
      %1042 = vadd.xlane.f32.xlu0 %v1041
      %v1043 = vpop.xlane.xlu0 %1042
      %v1044 = vsel %vm833, %v975, 0.0
      %1045 = vadd.xlane.f32.xlu0 %v1044
      %v1046 = vpop.xlane.xlu0 %1045
      %v1047 = vsel %vm833, %v977, 0.0
      %1048 = vadd.xlane.f32.xlu0 %v1047
      %v1049 = vpop.xlane.xlu0 %1048
      %v1050 = vsel %vm833, %v979, 0.0
      %1051 = vadd.xlane.f32.xlu0 %v1050
      %v1052 = vpop.xlane.xlu0 %1051
      %v1053 = vsel %vm833, %v981, 0.0
      %1054 = vadd.xlane.f32.xlu0 %v1053
      %v1055 = vpop.xlane.xlu0 %1054
      %v1056 = vsel %vm833, %v983, 0.0
      %1057 = vadd.xlane.f32.xlu0 %v1056
      %v1058 = vpop.xlane.xlu0 %1057
      %v1059 = vsel %vm833, %v985, 0.0
      %1060 = vadd.xlane.f32.xlu0 %v1059
      %v1061 = vpop.xlane.xlu0 %1060
      %v1062 = vsel %vm833, %v987, 0.0
      %1063 = vadd.xlane.f32.xlu0 %v1062
      %v1064 = vpop.xlane.xlu0 %1063
      %v1065 = vsel %vm833, %v989, 0.0
      %1066 = vadd.xlane.f32.xlu0 %v1065
      %v1067 = vpop.xlane.xlu0 %1066
      %v1068 = vsel %vm833, %v991, 0.0
      %1069 = vadd.xlane.f32.xlu0 %v1068
      %v1070 = vpop.xlane.xlu0 %1069
      %v1071 = vsel %vm833, %v993, 0.0
      %1072 = vadd.xlane.f32.xlu0 %v1071
      %v1073 = vpop.xlane.xlu0 %1072
      %v1074 = vsel %vm833, %v995, 0.0
      %1075 = vadd.xlane.f32.xlu0 %v1074
      %v1076 = vpop.xlane.xlu0 %1075
      %v1077 = vsel %vm833, %v997, 0.0
      %1078 = vadd.xlane.f32.xlu0 %v1077
      %v1079 = vpop.xlane.xlu0 %1078
      %v1080 = vsel %vm833, %v999, 0.0
      %1081 = vadd.xlane.f32.xlu0 %v1080
      %v1082 = vpop.xlane.xlu0 %1081
      %v1083 = vsel %vm833, %v1001, 0.0
      %1084 = vadd.xlane.f32.xlu0 %v1083
      %v1085 = vpop.xlane.xlu0 %1084
      %v1086 = vsel %vm833, %v1003, 0.0
      %1087 = vadd.xlane.f32.xlu0 %v1086
      %v1088 = vpop.xlane.xlu0 %1087
      %v1089 = vsel %vm833, %v1005, 0.0
      %1090 = vadd.xlane.f32.xlu0 %v1089
      %v1091 = vpop.xlane.xlu0 %1090
      %v1092 = vsel %vm833, %v1007, 0.0
      %1093 = vadd.xlane.f32.xlu0 %v1092
      %v1094 = vpop.xlane.xlu0 %1093
      %v1095 = vsel %vm833, %v1009, 0.0
      %1096 = vadd.xlane.f32.xlu0 %v1095
      %v1097 = vpop.xlane.xlu0 %1096
      %v1098 = vsel %vm833, %v1011, 0.0
      %1099 = vadd.xlane.f32.xlu0 %v1098
      %v1100 = vpop.xlane.xlu0 %1099
      %v1101 = vsel %vm833, %v1013, 0.0
      %1102 = vadd.xlane.f32.xlu0 %v1101
      %v1103 = vpop.xlane.xlu0 %1102
      %v1104 = vsel %vm833, %v1015, 0.0
      %1105 = vadd.xlane.f32.xlu0 %v1104
      %v1106 = vpop.xlane.xlu0 %1105
      %v1107 = vsel %vm833, %v1017, 0.0
      %1108 = vadd.xlane.f32.xlu0 %v1107
      %v1109 = vpop.xlane.xlu0 %1108
      %v1110 = vsel %vm833, %v1019, 0.0
      %1111 = vadd.xlane.f32.xlu0 %v1110
      %v1112 = vpop.xlane.xlu0 %1111
      %v1113 = vsel %vm833, %v1021, 0.0
      %1114 = vadd.xlane.f32.xlu0 %v1113
      %v1115 = vpop.xlane.xlu0 %1114
      %v1116 = vsel %vm833, %v1023, 0.0
      %1117 = vadd.xlane.f32.xlu0 %v1116
      %v1118 = vpop.xlane.xlu0 %1117
      %v1119 = vsel %vm833, %v1025, 0.0
      %1120 = vadd.xlane.f32.xlu0 %v1119
      %v1121 = vpop.xlane.xlu0 %1120
      %v1122 = vrcp.pop %v1028
      %v1123 = vrcp.pop %v1031
      %v1124 = vrcp.pop %v1034
      %v1125 = vrcp.pop %v1037
      %v1126 = vrcp.pop %v1040
      %v1127 = vrcp.pop %v1043
      %v1128 = vrcp.pop %v1046
      %v1129 = vrcp.pop %v1049
      %v1130 = vrcp.pop %v1052
      %v1131 = vrcp.pop %v1055
      %v1132 = vrcp.pop %v1058
      %v1133 = vrcp.pop %v1061
      %v1134 = vrcp.pop %v1064
      %v1135 = vrcp.pop %v1067
      %v1136 = vrcp.pop %v1070
      %v1137 = vrcp.pop %v1073
      %v1138 = vrcp.pop %v1076
      %v1139 = vrcp.pop %v1079
      %v1140 = vrcp.pop %v1082
      %v1141 = vrcp.pop %v1085
      %v1142 = vrcp.pop %v1088
      %v1143 = vrcp.pop %v1091
      %v1144 = vrcp.pop %v1094
      %v1145 = vrcp.pop %v1097
      %v1146 = vrcp.pop %v1100
      %v1147 = vrcp.pop %v1103
      %v1148 = vrcp.pop %v1106
      %v1149 = vrcp.pop %v1109
      %v1150 = vrcp.pop %v1112
      %v1151 = vrcp.pop %v1115
      %v1152 = vrcp.pop %v1118
      %v1153 = vrcp.pop %v1121
      %v1154 = vmul.f32 %v963, %v1122
      %v1155 = vmul.f32 %v965, %v1123
      %v1156 = vmul.f32 %v967, %v1124
      %v1157 = vmul.f32 %v969, %v1125
      %v1158 = vmul.f32 %v971, %v1126
      %v1159 = vmul.f32 %v973, %v1127
      %v1160 = vmul.f32 %v975, %v1128
      %v1161 = vmul.f32 %v977, %v1129
      %v1162 = vmul.f32 %v979, %v1130
      %v1163 = vmul.f32 %v981, %v1131
      %v1164 = vmul.f32 %v983, %v1132
      %v1165 = vmul.f32 %v985, %v1133
      %v1166 = vmul.f32 %v987, %v1134
      %v1167 = vmul.f32 %v989, %v1135
      %v1168 = vmul.f32 %v991, %v1136
      %v1169 = vmul.f32 %v993, %v1137
      %v1170 = vmul.f32 %v995, %v1138
      %v1171 = vmul.f32 %v997, %v1139
      %v1172 = vmul.f32 %v999, %v1140
      %v1173 = vmul.f32 %v1001, %v1141
      %v1174 = vmul.f32 %v1003, %v1142
      %v1175 = vmul.f32 %v1005, %v1143
      %v1176 = vmul.f32 %v1007, %v1144
      %v1177 = vmul.f32 %v1009, %v1145
      %v1178 = vmul.f32 %v1011, %v1146
      %v1179 = vmul.f32 %v1013, %v1147
      %v1180 = vmul.f32 %v1015, %v1148
      %v1181 = vmul.f32 %v1017, %v1149
      %v1182 = vmul.f32 %v1019, %v1150
      %v1183 = vmul.f32 %v1021, %v1151
      %v1184 = vmul.f32 %v1023, %v1152
      %v1185 = vmul.f32 %v1025, %v1153
      %v1187 = vsel %vm833, %v1154, 0
      %v1190 = vsel %vm833, %v1155, 0
      %v1193 = vsel %vm833, %v1156, 0
      %v1196 = vsel %vm833, %v1157, 0
      %v1199 = vsel %vm833, %v1158, 0
      %v1202 = vsel %vm833, %v1159, 0
      %v1205 = vsel %vm833, %v1160, 0
      %v1208 = vsel %vm833, %v1161, 0
      %v1211 = vsel %vm833, %v1162, 0
      %v1214 = vsel %vm833, %v1163, 0
      %v1217 = vsel %vm833, %v1164, 0
      %v1220 = vsel %vm833, %v1165, 0
      %v1223 = vsel %vm833, %v1166, 0
      %v1226 = vsel %vm833, %v1167, 0
      %v1229 = vsel %vm833, %v1168, 0
      %v1232 = vsel %vm833, %v1169, 0
      %v1235 = vsel %vm833, %v1170, 0
      %v1238 = vsel %vm833, %v1171, 0
      %v1241 = vsel %vm833, %v1172, 0
      %v1244 = vsel %vm833, %v1173, 0
      %v1247 = vsel %vm833, %v1174, 0
      %v1250 = vsel %vm833, %v1175, 0
      %v1253 = vsel %vm833, %v1176, 0
      %v1256 = vsel %vm833, %v1177, 0
      %v1259 = vsel %vm833, %v1178, 0
      %v1262 = vsel %vm833, %v1179, 0
      %v1265 = vsel %vm833, %v1180, 0
      %v1268 = vsel %vm833, %v1181, 0
      %v1271 = vsel %vm833, %v1182, 0
      %v1274 = vsel %vm833, %v1183, 0
      %v1277 = vsel %vm833, %v1184, 0
      %v1280 = vsel %vm833, %v1185, 0
      %1282 = vmatprep.subr.mxu0 0.0
      %1283 = vmatpush1.msra.mxu0 %v336
      %1284 = vmatprep.subr.mxu0 0.0
      %1285 = vmatpush1.msra.mxu0 %v337
      %1286 = vmatprep.subr.mxu0 0.0
      %1287 = vmatpush1.msra.mxu0 %v338
      %1288 = vmatprep.subr.mxu0 0.0
      %1289 = vmatpush1.msra.mxu0 %v339
      %1290 = vmatprep.subr.mxu0 0.0
      %1291 = vmatpush1.msra.mxu0 %v340
      %1292 = vmatprep.subr.mxu0 0.0
      %1293 = vmatpush1.msra.mxu0 %v341
      %1294 = vmatprep.subr.mxu0 0.0
      %1295 = vmatpush1.msra.mxu0 %v342
      %1296 = vmatprep.subr.mxu0 0.0
      %1297 = vmatpush1.msra.mxu0 %v343
      %1298 = vmatprep.subr.mxu0 0.0
      %1299 = vmatpush1.msra.mxu0 0.0
      %1300 = vmatprep.subr.mxu0 0.0
      %1301 = vmatpush1.msra.mxu0 0.0
      %1302 = vmatprep.subr.mxu0 0.0
      %1303 = vmatpush1.msra.mxu0 0.0
      %1304 = vmatprep.subr.mxu0 0.0
      %1305 = vmatpush1.msra.mxu0 0.0
      %1306 = vmatprep.subr.mxu0 0.0
      %1307 = vmatpush1.msra.mxu0 0.0
      %1308 = vmatprep.subr.mxu0 0.0
      %1309 = vmatpush1.msra.mxu0 0.0
      %1310 = vmatprep.subr.mxu0 0.0
      %1311 = vmatpush1.msra.mxu0 0.0
      %1312 = vmatprep.subr.mxu0 0.0
      %1313 = vmatpush1.msra.mxu0 0.0
      %1314 = vmatprep.subr.mxu0 0.0
      %1315 = vmatpush1.msra.mxu0 0.0
      %1316 = vmatprep.subr.mxu0 0.0
      %1317 = vmatpush1.msra.mxu0 0.0
      %1318 = vmatprep.subr.mxu0 0.0
      %1319 = vmatpush1.msra.mxu0 0.0
      %1320 = vmatprep.subr.mxu0 0.0
      %1321 = vmatpush1.msra.mxu0 0.0
      %1322 = vmatprep.subr.mxu0 0.0
      %1323 = vmatpush1.msra.mxu0 0.0
      %1324 = vmatprep.subr.mxu0 0.0
      %1325 = vmatpush1.msra.mxu0 0.0
      %1326 = vmatprep.subr.mxu0 0.0
      %1327 = vmatpush1.msra.mxu0 0.0
      %1328 = vmatprep.subr.mxu0 0.0
      %1329 = vmatpush1.msra.mxu0 0.0
      %1330 = vmatprep.subr.mxu0 0.0
      %1331 = vmatpush1.msra.mxu0 0.0
      %1332 = vmatprep.subr.mxu0 0.0
      %1333 = vmatpush1.msra.mxu0 0.0
      %1334 = vmatprep.subr.mxu0 0.0
      %1335 = vmatpush1.msra.mxu0 0.0
      %1336 = vmatprep.subr.mxu0 0.0
      %1337 = vmatpush1.msra.mxu0 0.0
      %1338 = vmatprep.subr.mxu0 0.0
      %1339 = vmatpush1.msra.mxu0 0.0
      %1340 = vmatprep.subr.mxu0 0.0
      %1341 = vmatpush1.msra.mxu0 0.0
      %1342 = vmatprep.subr.mxu0 0.0
      %1343 = vmatpush1.msra.mxu0 0.0
      %1344 = vmatprep.subr.mxu0 0.0
      %1345 = vmatpush1.msra.mxu0 0.0
      %1346 = vmatprep.mubr.f32.mxu0 0.0
      %1347 = vmatmul.mubr.f32.gmra.mrb[0].mxu0 %v1187
      %v1348 = vpop.f32.mrb[0].mxu0
      %v1349 = vadd.f32 0.0, %v1348
      %v1350 = vpop.f32.mrb[0].mxu0
      %1351 = vmatprep.mubr.f32.mxu0 0.0
      %1352 = vmatmul.mubr.f32.gmra.mrb[0].mxu0 %v1190
      %v1353 = vpop.f32.mrb[0].mxu0
      %v1354 = vadd.f32 0.0, %v1353
      %v1355 = vpop.f32.mrb[0].mxu0
      %1356 = vmatprep.mubr.f32.mxu0 0.0
      %1357 = vmatmul.mubr.f32.gmra.mrb[0].mxu0 %v1193
      %v1358 = vpop.f32.mrb[0].mxu0
      %v1359 = vadd.f32 0.0, %v1358
      %v1360 = vpop.f32.mrb[0].mxu0
      %1361 = vmatprep.mubr.f32.mxu0 0.0
      %1362 = vmatmul.mubr.f32.gmra.mrb[0].mxu0 %v1196
      %v1363 = vpop.f32.mrb[0].mxu0
      %v1364 = vadd.f32 0.0, %v1363
      %v1365 = vpop.f32.mrb[0].mxu0
      %1366 = vmatprep.mubr.f32.mxu0 0.0
      %1367 = vmatmul.mubr.f32.gmra.mrb[0].mxu0 %v1199
      %v1368 = vpop.f32.mrb[0].mxu0
      %v1369 = vadd.f32 0.0, %v1368
      %v1370 = vpop.f32.mrb[0].mxu0
      %1371 = vmatprep.mubr.f32.mxu0 0.0
      %1372 = vmatmul.mubr.f32.gmra.mrb[0].mxu0 %v1202
      %v1373 = vpop.f32.mrb[0].mxu0
      %v1374 = vadd.f32 0.0, %v1373
      %v1375 = vpop.f32.mrb[0].mxu0
      %1376 = vmatprep.mubr.f32.mxu0 0.0
      %1377 = vmatmul.mubr.f32.gmra.mrb[0].mxu0 %v1205
      %v1378 = vpop.f32.mrb[0].mxu0
      %v1379 = vadd.f32 0.0, %v1378
      %v1380 = vpop.f32.mrb[0].mxu0
      %1381 = vmatprep.mubr.f32.mxu0 0.0
      %1382 = vmatmul.mubr.f32.gmra.mrb[0].mxu0 %v1208
      %v1383 = vpop.f32.mrb[0].mxu0
      %v1384 = vadd.f32 0.0, %v1383
      %v1385 = vpop.f32.mrb[0].mxu0
      %1386 = vmatprep.mubr.f32.mxu0 0.0
      %1387 = vmatmul.mubr.f32.gmra.mrb[0].mxu0 %v1211
      %v1388 = vpop.f32.mrb[0].mxu0
      %v1389 = vadd.f32 0.0, %v1388
      %v1390 = vpop.f32.mrb[0].mxu0
      %1391 = vmatprep.mubr.f32.mxu0 0.0
      %1392 = vmatmul.mubr.f32.gmra.mrb[0].mxu0 %v1214
      %v1393 = vpop.f32.mrb[0].mxu0
      %v1394 = vadd.f32 0.0, %v1393
      %v1395 = vpop.f32.mrb[0].mxu0
      %1396 = vmatprep.mubr.f32.mxu0 0.0
      %1397 = vmatmul.mubr.f32.gmra.mrb[0].mxu0 %v1217
      %v1398 = vpop.f32.mrb[0].mxu0
      %v1399 = vadd.f32 0.0, %v1398
      %v1400 = vpop.f32.mrb[0].mxu0
      %1401 = vmatprep.mubr.f32.mxu0 0.0
      %1402 = vmatmul.mubr.f32.gmra.mrb[0].mxu0 %v1220
      %v1403 = vpop.f32.mrb[0].mxu0
      %v1404 = vadd.f32 0.0, %v1403
      %v1405 = vpop.f32.mrb[0].mxu0
      %1406 = vmatprep.mubr.f32.mxu0 0.0
      %1407 = vmatmul.mubr.f32.gmra.mrb[0].mxu0 %v1223
      %v1408 = vpop.f32.mrb[0].mxu0
      %v1409 = vadd.f32 0.0, %v1408
      %v1410 = vpop.f32.mrb[0].mxu0
      %1411 = vmatprep.mubr.f32.mxu0 0.0
      %1412 = vmatmul.mubr.f32.gmra.mrb[0].mxu0 %v1226
      %v1413 = vpop.f32.mrb[0].mxu0
      %v1414 = vadd.f32 0.0, %v1413
      %v1415 = vpop.f32.mrb[0].mxu0
      %1416 = vmatprep.mubr.f32.mxu0 0.0
      %1417 = vmatmul.mubr.f32.gmra.mrb[0].mxu0 %v1229
      %v1418 = vpop.f32.mrb[0].mxu0
      %v1419 = vadd.f32 0.0, %v1418
      %v1420 = vpop.f32.mrb[0].mxu0
      %1421 = vmatprep.mubr.f32.mxu0 0.0
      %1422 = vmatmul.mubr.f32.gmra.mrb[0].mxu0 %v1232
      %v1423 = vpop.f32.mrb[0].mxu0
      %v1424 = vadd.f32 0.0, %v1423
      %v1425 = vpop.f32.mrb[0].mxu0
      %1426 = vmatprep.mubr.f32.mxu0 0.0
      %1427 = vmatmul.mubr.f32.gmra.mrb[0].mxu0 %v1235
      %v1428 = vpop.f32.mrb[0].mxu0
      %v1429 = vadd.f32 0.0, %v1428
      %v1430 = vpop.f32.mrb[0].mxu0
      %1431 = vmatprep.mubr.f32.mxu0 0.0
      %1432 = vmatmul.mubr.f32.gmra.mrb[0].mxu0 %v1238
      %v1433 = vpop.f32.mrb[0].mxu0
      %v1434 = vadd.f32 0.0, %v1433
      %v1435 = vpop.f32.mrb[0].mxu0
      %1436 = vmatprep.mubr.f32.mxu0 0.0
      %1437 = vmatmul.mubr.f32.gmra.mrb[0].mxu0 %v1241
      %v1438 = vpop.f32.mrb[0].mxu0
      %v1439 = vadd.f32 0.0, %v1438
      %v1440 = vpop.f32.mrb[0].mxu0
      %1441 = vmatprep.mubr.f32.mxu0 0.0
      %1442 = vmatmul.mubr.f32.gmra.mrb[0].mxu0 %v1244
      %v1443 = vpop.f32.mrb[0].mxu0
      %v1444 = vadd.f32 0.0, %v1443
      %v1445 = vpop.f32.mrb[0].mxu0
      %1446 = vmatprep.mubr.f32.mxu0 0.0
      %1447 = vmatmul.mubr.f32.gmra.mrb[0].mxu0 %v1247
      %v1448 = vpop.f32.mrb[0].mxu0
      %v1449 = vadd.f32 0.0, %v1448
      %v1450 = vpop.f32.mrb[0].mxu0
      %1451 = vmatprep.mubr.f32.mxu0 0.0
      %1452 = vmatmul.mubr.f32.gmra.mrb[0].mxu0 %v1250
      %v1453 = vpop.f32.mrb[0].mxu0
      %v1454 = vadd.f32 0.0, %v1453
      %v1455 = vpop.f32.mrb[0].mxu0
      %1456 = vmatprep.mubr.f32.mxu0 0.0
      %1457 = vmatmul.mubr.f32.gmra.mrb[0].mxu0 %v1253
      %v1458 = vpop.f32.mrb[0].mxu0
      %v1459 = vadd.f32 0.0, %v1458
      %v1460 = vpop.f32.mrb[0].mxu0
      %1461 = vmatprep.mubr.f32.mxu0 0.0
      %1462 = vmatmul.mubr.f32.gmra.mrb[0].mxu0 %v1256
      %v1463 = vpop.f32.mrb[0].mxu0
      %v1464 = vadd.f32 0.0, %v1463
      %v1465 = vpop.f32.mrb[0].mxu0
      %1466 = vmatprep.mubr.f32.mxu0 0.0
      %1467 = vmatmul.mubr.f32.gmra.mrb[0].mxu0 %v1259
      %v1468 = vpop.f32.mrb[0].mxu0
      %v1469 = vadd.f32 0.0, %v1468
      %v1470 = vpop.f32.mrb[0].mxu0
      %1471 = vmatprep.mubr.f32.mxu0 0.0
      %1472 = vmatmul.mubr.f32.gmra.mrb[0].mxu0 %v1262
      %v1473 = vpop.f32.mrb[0].mxu0
      %v1474 = vadd.f32 0.0, %v1473
      %v1475 = vpop.f32.mrb[0].mxu0
      %1476 = vmatprep.mubr.f32.mxu0 0.0
      %1477 = vmatmul.mubr.f32.gmra.mrb[0].mxu0 %v1265
      %v1478 = vpop.f32.mrb[0].mxu0
      %v1479 = vadd.f32 0.0, %v1478
      %v1480 = vpop.f32.mrb[0].mxu0
      %1481 = vmatprep.mubr.f32.mxu0 0.0
      %1482 = vmatmul.mubr.f32.gmra.mrb[0].mxu0 %v1268
      %v1483 = vpop.f32.mrb[0].mxu0
      %v1484 = vadd.f32 0.0, %v1483
      %v1485 = vpop.f32.mrb[0].mxu0
      %1486 = vmatprep.mubr.f32.mxu0 0.0
      %1487 = vmatmul.mubr.f32.gmra.mrb[0].mxu0 %v1271
      %v1488 = vpop.f32.mrb[0].mxu0
      %v1489 = vadd.f32 0.0, %v1488
      %v1490 = vpop.f32.mrb[0].mxu0
      %1491 = vmatprep.mubr.f32.mxu0 0.0
      %1492 = vmatmul.mubr.f32.gmra.mrb[0].mxu0 %v1274
      %v1493 = vpop.f32.mrb[0].mxu0
      %v1494 = vadd.f32 0.0, %v1493
      %v1495 = vpop.f32.mrb[0].mxu0
      %1496 = vmatprep.mubr.f32.mxu0 0.0
      %1497 = vmatmul.mubr.f32.gmra.mrb[0].mxu0 %v1277
      %v1498 = vpop.f32.mrb[0].mxu0
      %v1499 = vadd.f32 0.0, %v1498
      %v1500 = vpop.f32.mrb[0].mxu0
      %1501 = vmatprep.mubr.f32.mxu0 0.0
      %1502 = vmatmul.mubr.f32.gmra.mrb[0].mxu0 %v1280
      %v1503 = vpop.f32.mrb[0].mxu0
      %v1504 = vadd.f32 0.0, %v1503
      %v1505 = vpop.f32.mrb[0].mxu0
      %1506 = vdwg.mxu0
      %v1507 = vxor.u32 %v450, 2147483648
      %v1508 = vxor.u32 %v455, 2147483648
      %v1509 = vxor.u32 %v460, 2147483648
      %v1510 = vxor.u32 %v465, 2147483648
      %v1511 = vxor.u32 %v470, 2147483648
      %v1512 = vxor.u32 %v475, 2147483648
      %v1513 = vxor.u32 %v480, 2147483648
      %v1514 = vxor.u32 %v485, 2147483648
      %v1515 = vxor.u32 %v490, 2147483648
      %v1516 = vxor.u32 %v495, 2147483648
      %v1517 = vxor.u32 %v500, 2147483648
      %v1518 = vxor.u32 %v505, 2147483648
      %v1519 = vxor.u32 %v510, 2147483648
      %v1520 = vxor.u32 %v515, 2147483648
      %v1521 = vxor.u32 %v520, 2147483648
      %v1522 = vxor.u32 %v525, 2147483648
      %v1523 = vxor.u32 %v530, 2147483648
      %v1524 = vxor.u32 %v535, 2147483648
      %v1525 = vxor.u32 %v540, 2147483648
      %v1526 = vxor.u32 %v545, 2147483648
      %v1527 = vxor.u32 %v550, 2147483648
      %v1528 = vxor.u32 %v555, 2147483648
      %v1529 = vxor.u32 %v560, 2147483648
      %v1530 = vxor.u32 %v565, 2147483648
      %v1531 = vxor.u32 %v570, 2147483648
      %v1532 = vxor.u32 %v575, 2147483648
      %v1533 = vxor.u32 %v580, 2147483648
      %v1534 = vxor.u32 %v585, 2147483648
      %v1535 = vxor.u32 %v590, 2147483648
      %v1536 = vxor.u32 %v595, 2147483648
      %v1537 = vxor.u32 %v600, 2147483648
      %v1538 = vxor.u32 %v605, 2147483648
      %v1539 = vmul.f32 %v1507, 1.442695
      %v1540 = vpow.pop %v1539
      %v1541 = vmul.f32 %v1508, 1.442695
      %v1542 = vpow.pop %v1541
      %v1543 = vmul.f32 %v1509, 1.442695
      %v1544 = vpow.pop %v1543
      %v1545 = vmul.f32 %v1510, 1.442695
      %v1546 = vpow.pop %v1545
      %v1547 = vmul.f32 %v1511, 1.442695
      %v1548 = vpow.pop %v1547
      %v1549 = vmul.f32 %v1512, 1.442695
      %v1550 = vpow.pop %v1549
      %v1551 = vmul.f32 %v1513, 1.442695
      %v1552 = vpow.pop %v1551
      %v1553 = vmul.f32 %v1514, 1.442695
      %v1554 = vpow.pop %v1553
      %v1555 = vmul.f32 %v1515, 1.442695
      %v1556 = vpow.pop %v1555
      %v1557 = vmul.f32 %v1516, 1.442695
      %v1558 = vpow.pop %v1557
      %v1559 = vmul.f32 %v1517, 1.442695
      %v1560 = vpow.pop %v1559
      %v1561 = vmul.f32 %v1518, 1.442695
      %v1562 = vpow.pop %v1561
      %v1563 = vmul.f32 %v1519, 1.442695
      %v1564 = vpow.pop %v1563
      %v1565 = vmul.f32 %v1520, 1.442695
      %v1566 = vpow.pop %v1565
      %v1567 = vmul.f32 %v1521, 1.442695
      %v1568 = vpow.pop %v1567
      %v1569 = vmul.f32 %v1522, 1.442695
      %v1570 = vpow.pop %v1569
      %v1571 = vmul.f32 %v1523, 1.442695
      %v1572 = vpow.pop %v1571
      %v1573 = vmul.f32 %v1524, 1.442695
      %v1574 = vpow.pop %v1573
      %v1575 = vmul.f32 %v1525, 1.442695
      %v1576 = vpow.pop %v1575
      %v1577 = vmul.f32 %v1526, 1.442695
      %v1578 = vpow.pop %v1577
      %v1579 = vmul.f32 %v1527, 1.442695
      %v1580 = vpow.pop %v1579
      %v1581 = vmul.f32 %v1528, 1.442695
      %v1582 = vpow.pop %v1581
      %v1583 = vmul.f32 %v1529, 1.442695
      %v1584 = vpow.pop %v1583
      %v1585 = vmul.f32 %v1530, 1.442695
      %v1586 = vpow.pop %v1585
      %v1587 = vmul.f32 %v1531, 1.442695
      %v1588 = vpow.pop %v1587
      %v1589 = vmul.f32 %v1532, 1.442695
      %v1590 = vpow.pop %v1589
      %v1591 = vmul.f32 %v1533, 1.442695
      %v1592 = vpow.pop %v1591
      %v1593 = vmul.f32 %v1534, 1.442695
      %v1594 = vpow.pop %v1593
      %v1595 = vmul.f32 %v1535, 1.442695
      %v1596 = vpow.pop %v1595
      %v1597 = vmul.f32 %v1536, 1.442695
      %v1598 = vpow.pop %v1597
      %v1599 = vmul.f32 %v1537, 1.442695
      %v1600 = vpow.pop %v1599
      %v1601 = vmul.f32 %v1538, 1.442695
      %v1602 = vpow.pop %v1601
      %v1603 = vadd.f32 %v1540, 1.0
      %v1604 = vadd.f32 %v1542, 1.0
      %v1605 = vadd.f32 %v1544, 1.0
      %v1606 = vadd.f32 %v1546, 1.0
      %v1607 = vadd.f32 %v1548, 1.0
      %v1608 = vadd.f32 %v1550, 1.0
      %v1609 = vadd.f32 %v1552, 1.0
      %v1610 = vadd.f32 %v1554, 1.0
      %v1611 = vadd.f32 %v1556, 1.0
      %v1612 = vadd.f32 %v1558, 1.0
      %v1613 = vadd.f32 %v1560, 1.0
      %v1614 = vadd.f32 %v1562, 1.0
      %v1615 = vadd.f32 %v1564, 1.0
      %v1616 = vadd.f32 %v1566, 1.0
      %v1617 = vadd.f32 %v1568, 1.0
      %v1618 = vadd.f32 %v1570, 1.0
      %v1619 = vadd.f32 %v1572, 1.0
      %v1620 = vadd.f32 %v1574, 1.0
      %v1621 = vadd.f32 %v1576, 1.0
      %v1622 = vadd.f32 %v1578, 1.0
      %v1623 = vadd.f32 %v1580, 1.0
      %v1624 = vadd.f32 %v1582, 1.0
      %v1625 = vadd.f32 %v1584, 1.0
      %v1626 = vadd.f32 %v1586, 1.0
      %v1627 = vadd.f32 %v1588, 1.0
      %v1628 = vadd.f32 %v1590, 1.0
      %v1629 = vadd.f32 %v1592, 1.0
      %v1630 = vadd.f32 %v1594, 1.0
      %v1631 = vadd.f32 %v1596, 1.0
      %v1632 = vadd.f32 %v1598, 1.0
      %v1633 = vadd.f32 %v1600, 1.0
      %v1634 = vadd.f32 %v1602, 1.0
      %v1635 = vrcp.pop %v1603
      %v1636 = vmul.f32 1.0, %v1635
      %v1637 = vrcp.pop %v1604
      %v1638 = vmul.f32 1.0, %v1637
      %v1639 = vrcp.pop %v1605
      %v1640 = vmul.f32 1.0, %v1639
      %v1641 = vrcp.pop %v1606
      %v1642 = vmul.f32 1.0, %v1641
      %v1643 = vrcp.pop %v1607
      %v1644 = vmul.f32 1.0, %v1643
      %v1645 = vrcp.pop %v1608
      %v1646 = vmul.f32 1.0, %v1645
      %v1647 = vrcp.pop %v1609
      %v1648 = vmul.f32 1.0, %v1647
      %v1649 = vrcp.pop %v1610
      %v1650 = vmul.f32 1.0, %v1649
      %v1651 = vrcp.pop %v1611
      %v1652 = vmul.f32 1.0, %v1651
      %v1653 = vrcp.pop %v1612
      %v1654 = vmul.f32 1.0, %v1653
      %v1655 = vrcp.pop %v1613
      %v1656 = vmul.f32 1.0, %v1655
      %v1657 = vrcp.pop %v1614
      %v1658 = vmul.f32 1.0, %v1657
      %v1659 = vrcp.pop %v1615
      %v1660 = vmul.f32 1.0, %v1659
      %v1661 = vrcp.pop %v1616
      %v1662 = vmul.f32 1.0, %v1661
      %v1663 = vrcp.pop %v1617
      %v1664 = vmul.f32 1.0, %v1663
      %v1665 = vrcp.pop %v1618
      %v1666 = vmul.f32 1.0, %v1665
      %v1667 = vrcp.pop %v1619
      %v1668 = vmul.f32 1.0, %v1667
      %v1669 = vrcp.pop %v1620
      %v1670 = vmul.f32 1.0, %v1669
      %v1671 = vrcp.pop %v1621
      %v1672 = vmul.f32 1.0, %v1671
      %v1673 = vrcp.pop %v1622
      %v1674 = vmul.f32 1.0, %v1673
      %v1675 = vrcp.pop %v1623
      %v1676 = vmul.f32 1.0, %v1675
      %v1677 = vrcp.pop %v1624
      %v1678 = vmul.f32 1.0, %v1677
      %v1679 = vrcp.pop %v1625
      %v1680 = vmul.f32 1.0, %v1679
      %v1681 = vrcp.pop %v1626
      %v1682 = vmul.f32 1.0, %v1681
      %v1683 = vrcp.pop %v1627
      %v1684 = vmul.f32 1.0, %v1683
      %v1685 = vrcp.pop %v1628
      %v1686 = vmul.f32 1.0, %v1685
      %v1687 = vrcp.pop %v1629
      %v1688 = vmul.f32 1.0, %v1687
      %v1689 = vrcp.pop %v1630
      %v1690 = vmul.f32 1.0, %v1689
      %v1691 = vrcp.pop %v1631
      %v1692 = vmul.f32 1.0, %v1691
      %v1693 = vrcp.pop %v1632
      %v1694 = vmul.f32 1.0, %v1693
      %v1695 = vrcp.pop %v1633
      %v1696 = vmul.f32 1.0, %v1695
      %v1697 = vrcp.pop %v1634
      %v1698 = vmul.f32 1.0, %v1697
      %v1699 = vsub.f32 1.0, %v1636
      %v1700 = vsub.f32 1.0, %v1638
      %v1701 = vsub.f32 1.0, %v1640
      %v1702 = vsub.f32 1.0, %v1642
      %v1703 = vsub.f32 1.0, %v1644
      %v1704 = vsub.f32 1.0, %v1646
      %v1705 = vsub.f32 1.0, %v1648
      %v1706 = vsub.f32 1.0, %v1650
      %v1707 = vsub.f32 1.0, %v1652
      %v1708 = vsub.f32 1.0, %v1654
      %v1709 = vsub.f32 1.0, %v1656
      %v1710 = vsub.f32 1.0, %v1658
      %v1711 = vsub.f32 1.0, %v1660
      %v1712 = vsub.f32 1.0, %v1662
      %v1713 = vsub.f32 1.0, %v1664
      %v1714 = vsub.f32 1.0, %v1666
      %v1715 = vsub.f32 1.0, %v1668
      %v1716 = vsub.f32 1.0, %v1670
      %v1717 = vsub.f32 1.0, %v1672
      %v1718 = vsub.f32 1.0, %v1674
      %v1719 = vsub.f32 1.0, %v1676
      %v1720 = vsub.f32 1.0, %v1678
      %v1721 = vsub.f32 1.0, %v1680
      %v1722 = vsub.f32 1.0, %v1682
      %v1723 = vsub.f32 1.0, %v1684
      %v1724 = vsub.f32 1.0, %v1686
      %v1725 = vsub.f32 1.0, %v1688
      %v1726 = vsub.f32 1.0, %v1690
      %v1727 = vsub.f32 1.0, %v1692
      %v1728 = vsub.f32 1.0, %v1694
      %v1729 = vsub.f32 1.0, %v1696
      %v1730 = vsub.f32 1.0, %v1698
      %1732 = vset.pattern.permute.xlu0 4
      %1733 = vperm.xlu0 %1732, %v1699
      %v1734 = vpop.permute.xlu0 %1733
      %1737 = vset.pattern.permute.xlu0 4
      %1738 = vperm.xlu0 %1737, %v1700
      %v1739 = vpop.permute.xlu0 %1738
      %1742 = vset.pattern.permute.xlu0 4
      %1743 = vperm.xlu0 %1742, %v1701
      %v1744 = vpop.permute.xlu0 %1743
      %1747 = vset.pattern.permute.xlu0 4
      %1748 = vperm.xlu0 %1747, %v1702
      %v1749 = vpop.permute.xlu0 %1748
      %1752 = vset.pattern.permute.xlu0 4
      %1753 = vperm.xlu0 %1752, %v1703
      %v1754 = vpop.permute.xlu0 %1753
      %1757 = vset.pattern.permute.xlu0 4
      %1758 = vperm.xlu0 %1757, %v1704
      %v1759 = vpop.permute.xlu0 %1758
      %1762 = vset.pattern.permute.xlu0 4
      %1763 = vperm.xlu0 %1762, %v1705
      %v1764 = vpop.permute.xlu0 %1763
      %1767 = vset.pattern.permute.xlu0 4
      %1768 = vperm.xlu0 %1767, %v1706
      %v1769 = vpop.permute.xlu0 %1768
      %1772 = vset.pattern.permute.xlu0 4
      %1773 = vperm.xlu0 %1772, %v1707
      %v1774 = vpop.permute.xlu0 %1773
      %1777 = vset.pattern.permute.xlu0 4
      %1778 = vperm.xlu0 %1777, %v1708
      %v1779 = vpop.permute.xlu0 %1778
      %1782 = vset.pattern.permute.xlu0 4
      %1783 = vperm.xlu0 %1782, %v1709
      %v1784 = vpop.permute.xlu0 %1783
      %1787 = vset.pattern.permute.xlu0 4
      %1788 = vperm.xlu0 %1787, %v1710
      %v1789 = vpop.permute.xlu0 %1788
      %1792 = vset.pattern.permute.xlu0 4
      %1793 = vperm.xlu0 %1792, %v1711
      %v1794 = vpop.permute.xlu0 %1793
      %1797 = vset.pattern.permute.xlu0 4
      %1798 = vperm.xlu0 %1797, %v1712
      %v1799 = vpop.permute.xlu0 %1798
      %1802 = vset.pattern.permute.xlu0 4
      %1803 = vperm.xlu0 %1802, %v1713
      %v1804 = vpop.permute.xlu0 %1803
      %1807 = vset.pattern.permute.xlu0 4
      %1808 = vperm.xlu0 %1807, %v1714
      %v1809 = vpop.permute.xlu0 %1808
      %1812 = vset.pattern.permute.xlu0 4
      %1813 = vperm.xlu0 %1812, %v1715
      %v1814 = vpop.permute.xlu0 %1813
      %1817 = vset.pattern.permute.xlu0 4
      %1818 = vperm.xlu0 %1817, %v1716
      %v1819 = vpop.permute.xlu0 %1818
      %1822 = vset.pattern.permute.xlu0 4
      %1823 = vperm.xlu0 %1822, %v1717
      %v1824 = vpop.permute.xlu0 %1823
      %1827 = vset.pattern.permute.xlu0 4
      %1828 = vperm.xlu0 %1827, %v1718
      %v1829 = vpop.permute.xlu0 %1828
      %1832 = vset.pattern.permute.xlu0 4
      %1833 = vperm.xlu0 %1832, %v1719
      %v1834 = vpop.permute.xlu0 %1833
      %1837 = vset.pattern.permute.xlu0 4
      %1838 = vperm.xlu0 %1837, %v1720
      %v1839 = vpop.permute.xlu0 %1838
      %1842 = vset.pattern.permute.xlu0 4
      %1843 = vperm.xlu0 %1842, %v1721
      %v1844 = vpop.permute.xlu0 %1843
      %1847 = vset.pattern.permute.xlu0 4
      %1848 = vperm.xlu0 %1847, %v1722
      %v1849 = vpop.permute.xlu0 %1848
      %1852 = vset.pattern.permute.xlu0 4
      %1853 = vperm.xlu0 %1852, %v1723
      %v1854 = vpop.permute.xlu0 %1853
      %1857 = vset.pattern.permute.xlu0 4
      %1858 = vperm.xlu0 %1857, %v1724
      %v1859 = vpop.permute.xlu0 %1858
      %1862 = vset.pattern.permute.xlu0 4
      %1863 = vperm.xlu0 %1862, %v1725
      %v1864 = vpop.permute.xlu0 %1863
      %1867 = vset.pattern.permute.xlu0 4
      %1868 = vperm.xlu0 %1867, %v1726
      %v1869 = vpop.permute.xlu0 %1868
      %1872 = vset.pattern.permute.xlu0 4
      %1873 = vperm.xlu0 %1872, %v1727
      %v1874 = vpop.permute.xlu0 %1873
      %1877 = vset.pattern.permute.xlu0 4
      %1878 = vperm.xlu0 %1877, %v1728
      %v1879 = vpop.permute.xlu0 %1878
      %1882 = vset.pattern.permute.xlu0 4
      %1883 = vperm.xlu0 %1882, %v1729
      %v1884 = vpop.permute.xlu0 %1883
      %1887 = vset.pattern.permute.xlu0 4
      %1888 = vperm.xlu0 %1887, %v1730
      %v1889 = vpop.permute.xlu0 %1888
      %v1891 = vmul.f32 %v1734, %v1349
      %v1892 = vmul.f32 %v1739, %v1354
      %v1893 = vmul.f32 %v1744, %v1359
      %v1894 = vmul.f32 %v1749, %v1364
      %v1895 = vmul.f32 %v1754, %v1369
      %v1896 = vmul.f32 %v1759, %v1374
      %v1897 = vmul.f32 %v1764, %v1379
      %v1898 = vmul.f32 %v1769, %v1384
      %v1899 = vmul.f32 %v1774, %v1389
      %v1900 = vmul.f32 %v1779, %v1394
      %v1901 = vmul.f32 %v1784, %v1399
      %v1902 = vmul.f32 %v1789, %v1404
      %v1903 = vmul.f32 %v1794, %v1409
      %v1904 = vmul.f32 %v1799, %v1414
      %v1905 = vmul.f32 %v1804, %v1419
      %v1906 = vmul.f32 %v1809, %v1424
      %v1907 = vmul.f32 %v1814, %v1429
      %v1908 = vmul.f32 %v1819, %v1434
      %v1909 = vmul.f32 %v1824, %v1439
      %v1910 = vmul.f32 %v1829, %v1444
      %v1911 = vmul.f32 %v1834, %v1449
      %v1912 = vmul.f32 %v1839, %v1454
      %v1913 = vmul.f32 %v1844, %v1459
      %v1914 = vmul.f32 %v1849, %v1464
      %v1915 = vmul.f32 %v1854, %v1469
      %v1916 = vmul.f32 %v1859, %v1474
      %v1917 = vmul.f32 %v1864, %v1479
      %v1918 = vmul.f32 %v1869, %v1484
      %v1919 = vmul.f32 %v1874, %v1489
      %v1920 = vmul.f32 %v1879, %v1494
      %v1921 = vmul.f32 %v1884, %v1499
      %v1922 = vmul.f32 %v1889, %v1504
      %1924 = vset.pattern.permute.xlu0 4
      %1925 = vperm.xlu0 %1924, %v1636
      %v1926 = vpop.permute.xlu0 %1925
      %1929 = vset.pattern.permute.xlu0 4
      %1930 = vperm.xlu0 %1929, %v1638
      %v1931 = vpop.permute.xlu0 %1930
      %1934 = vset.pattern.permute.xlu0 4
      %1935 = vperm.xlu0 %1934, %v1640
      %v1936 = vpop.permute.xlu0 %1935
      %1939 = vset.pattern.permute.xlu0 4
      %1940 = vperm.xlu0 %1939, %v1642
      %v1941 = vpop.permute.xlu0 %1940
      %1944 = vset.pattern.permute.xlu0 4
      %1945 = vperm.xlu0 %1944, %v1644
      %v1946 = vpop.permute.xlu0 %1945
      %1949 = vset.pattern.permute.xlu0 4
      %1950 = vperm.xlu0 %1949, %v1646
      %v1951 = vpop.permute.xlu0 %1950
      %1954 = vset.pattern.permute.xlu0 4
      %1955 = vperm.xlu0 %1954, %v1648
      %v1956 = vpop.permute.xlu0 %1955
      %1959 = vset.pattern.permute.xlu0 4
      %1960 = vperm.xlu0 %1959, %v1650
      %v1961 = vpop.permute.xlu0 %1960
      %1964 = vset.pattern.permute.xlu0 4
      %1965 = vperm.xlu0 %1964, %v1652
      %v1966 = vpop.permute.xlu0 %1965
      %1969 = vset.pattern.permute.xlu0 4
      %1970 = vperm.xlu0 %1969, %v1654
      %v1971 = vpop.permute.xlu0 %1970
      %1974 = vset.pattern.permute.xlu0 4
      %1975 = vperm.xlu0 %1974, %v1656
      %v1976 = vpop.permute.xlu0 %1975
      %1979 = vset.pattern.permute.xlu0 4
      %1980 = vperm.xlu0 %1979, %v1658
      %v1981 = vpop.permute.xlu0 %1980
      %1984 = vset.pattern.permute.xlu0 4
      %1985 = vperm.xlu0 %1984, %v1660
      %v1986 = vpop.permute.xlu0 %1985
      %1989 = vset.pattern.permute.xlu0 4
      %1990 = vperm.xlu0 %1989, %v1662
      %v1991 = vpop.permute.xlu0 %1990
      %1994 = vset.pattern.permute.xlu0 4
      %1995 = vperm.xlu0 %1994, %v1664
      %v1996 = vpop.permute.xlu0 %1995
      %1999 = vset.pattern.permute.xlu0 4
      %2000 = vperm.xlu0 %1999, %v1666
      %v2001 = vpop.permute.xlu0 %2000
      %2004 = vset.pattern.permute.xlu0 4
      %2005 = vperm.xlu0 %2004, %v1668
      %v2006 = vpop.permute.xlu0 %2005
      %2009 = vset.pattern.permute.xlu0 4
      %2010 = vperm.xlu0 %2009, %v1670
      %v2011 = vpop.permute.xlu0 %2010
      %2014 = vset.pattern.permute.xlu0 4
      %2015 = vperm.xlu0 %2014, %v1672
      %v2016 = vpop.permute.xlu0 %2015
      %2019 = vset.pattern.permute.xlu0 4
      %2020 = vperm.xlu0 %2019, %v1674
      %v2021 = vpop.permute.xlu0 %2020
      %2024 = vset.pattern.permute.xlu0 4
      %2025 = vperm.xlu0 %2024, %v1676
      %v2026 = vpop.permute.xlu0 %2025
      %2029 = vset.pattern.permute.xlu0 4
      %2030 = vperm.xlu0 %2029, %v1678
      %v2031 = vpop.permute.xlu0 %2030
      %2034 = vset.pattern.permute.xlu0 4
      %2035 = vperm.xlu0 %2034, %v1680
      %v2036 = vpop.permute.xlu0 %2035
      %2039 = vset.pattern.permute.xlu0 4
      %2040 = vperm.xlu0 %2039, %v1682
      %v2041 = vpop.permute.xlu0 %2040
      %2044 = vset.pattern.permute.xlu0 4
      %2045 = vperm.xlu0 %2044, %v1684
      %v2046 = vpop.permute.xlu0 %2045
      %2049 = vset.pattern.permute.xlu0 4
      %2050 = vperm.xlu0 %2049, %v1686
      %v2051 = vpop.permute.xlu0 %2050
      %2054 = vset.pattern.permute.xlu0 4
      %2055 = vperm.xlu0 %2054, %v1688
      %v2056 = vpop.permute.xlu0 %2055
      %2059 = vset.pattern.permute.xlu0 4
      %2060 = vperm.xlu0 %2059, %v1690
      %v2061 = vpop.permute.xlu0 %2060
      %2064 = vset.pattern.permute.xlu0 4
      %2065 = vperm.xlu0 %2064, %v1692
      %v2066 = vpop.permute.xlu0 %2065
      %2069 = vset.pattern.permute.xlu0 4
      %2070 = vperm.xlu0 %2069, %v1694
      %v2071 = vpop.permute.xlu0 %2070
      %2074 = vset.pattern.permute.xlu0 4
      %2075 = vperm.xlu0 %2074, %v1696
      %v2076 = vpop.permute.xlu0 %2075
      %2079 = vset.pattern.permute.xlu0 4
      %2080 = vperm.xlu0 %2079, %v1698
      %v2081 = vpop.permute.xlu0 %2080
      %v2083 = vmul.f32 %v1926, %v304
      %v2084 = vmul.f32 %v1931, %v305
      %v2085 = vmul.f32 %v1936, %v306
      %v2086 = vmul.f32 %v1941, %v307
      %v2087 = vmul.f32 %v1946, %v308
      %v2088 = vmul.f32 %v1951, %v309
      %v2089 = vmul.f32 %v1956, %v310
      %v2090 = vmul.f32 %v1961, %v311
      %v2091 = vmul.f32 %v1966, %v312
      %v2092 = vmul.f32 %v1971, %v313
      %v2093 = vmul.f32 %v1976, %v314
      %v2094 = vmul.f32 %v1981, %v315
      %v2095 = vmul.f32 %v1986, %v316
      %v2096 = vmul.f32 %v1991, %v317
      %v2097 = vmul.f32 %v1996, %v318
      %v2098 = vmul.f32 %v2001, %v319
      %v2099 = vmul.f32 %v2006, %v320
      %v2100 = vmul.f32 %v2011, %v321
      %v2101 = vmul.f32 %v2016, %v322
      %v2102 = vmul.f32 %v2021, %v323
      %v2103 = vmul.f32 %v2026, %v324
      %v2104 = vmul.f32 %v2031, %v325
      %v2105 = vmul.f32 %v2036, %v326
      %v2106 = vmul.f32 %v2041, %v327
      %v2107 = vmul.f32 %v2046, %v328
      %v2108 = vmul.f32 %v2051, %v329
      %v2109 = vmul.f32 %v2056, %v330
      %v2110 = vmul.f32 %v2061, %v331
      %v2111 = vmul.f32 %v2066, %v332
      %v2112 = vmul.f32 %v2071, %v333
      %v2113 = vmul.f32 %v2076, %v334
      %v2114 = vmul.f32 %v2081, %v335
      %v2115 = vadd.f32 %v1891, %v2083
      %v2116 = vadd.f32 %v1892, %v2084
      %v2117 = vadd.f32 %v1893, %v2085
      %v2118 = vadd.f32 %v1894, %v2086
      %v2119 = vadd.f32 %v1895, %v2087
      %v2120 = vadd.f32 %v1896, %v2088
      %v2121 = vadd.f32 %v1897, %v2089
      %v2122 = vadd.f32 %v1898, %v2090
      %v2123 = vadd.f32 %v1899, %v2091
      %v2124 = vadd.f32 %v1900, %v2092
      %v2125 = vadd.f32 %v1901, %v2093
      %v2126 = vadd.f32 %v1902, %v2094
      %v2127 = vadd.f32 %v1903, %v2095
      %v2128 = vadd.f32 %v1904, %v2096
      %v2129 = vadd.f32 %v1905, %v2097
      %v2130 = vadd.f32 %v1906, %v2098
      %v2131 = vadd.f32 %v1907, %v2099
      %v2132 = vadd.f32 %v1908, %v2100
      %v2133 = vadd.f32 %v1909, %v2101
      %v2134 = vadd.f32 %v1910, %v2102
      %v2135 = vadd.f32 %v1911, %v2103
      %v2136 = vadd.f32 %v1912, %v2104
      %v2137 = vadd.f32 %v1913, %v2105
      %v2138 = vadd.f32 %v1914, %v2106
      %v2139 = vadd.f32 %v1915, %v2107
      %v2140 = vadd.f32 %v1916, %v2108
      %v2141 = vadd.f32 %v1917, %v2109
      %v2142 = vadd.f32 %v1918, %v2110
      %v2143 = vadd.f32 %v1919, %v2111
      %v2144 = vadd.f32 %v1920, %v2112
      %v2145 = vadd.f32 %v1921, %v2113
      %v2146 = vadd.f32 %v1922, %v2114
      %2147 = vst [vmem:[%s302] sm:$0xff] %v2115
      %2148 = vst [vmem:[%s302 + $0x8] sm:$0xff] %v2116
      %2149 = vst [vmem:[%s302 + $0x10] sm:$0xff] %v2117
      %2150 = vst [vmem:[%s302 + $0x18] sm:$0xff] %v2118
      %2151 = vst [vmem:[%s302 + $0x20] sm:$0xff] %v2119
      %2152 = vst [vmem:[%s302 + $0x28] sm:$0xff] %v2120
      %2153 = vst [vmem:[%s302 + $0x30] sm:$0xff] %v2121
      %2154 = vst [vmem:[%s302 + $0x38] sm:$0xff] %v2122
      %2155 = vst [vmem:[%s302 + $0x40] sm:$0xff] %v2123
      %2156 = vst [vmem:[%s302 + $0x48] sm:$0xff] %v2124
      %2157 = vst [vmem:[%s302 + $0x50] sm:$0xff] %v2125
      %2158 = vst [vmem:[%s302 + $0x58] sm:$0xff] %v2126
      %2159 = vst [vmem:[%s302 + $0x60] sm:$0xff] %v2127
      %2160 = vst [vmem:[%s302 + $0x68] sm:$0xff] %v2128
      %2161 = vst [vmem:[%s302 + $0x70] sm:$0xff] %v2129
      %2162 = vst [vmem:[%s302 + $0x78] sm:$0xff] %v2130
      %2163 = vst [vmem:[%s302 + $0x80] sm:$0xff] %v2131
      %2164 = vst [vmem:[%s302 + $0x88] sm:$0xff] %v2132
      %2165 = vst [vmem:[%s302 + $0x90] sm:$0xff] %v2133
      %2166 = vst [vmem:[%s302 + $0x98] sm:$0xff] %v2134
      %2167 = vst [vmem:[%s302 + $0xa0] sm:$0xff] %v2135
      %2168 = vst [vmem:[%s302 + $0xa8] sm:$0xff] %v2136
      %2169 = vst [vmem:[%s302 + $0xb0] sm:$0xff] %v2137
      %2170 = vst [vmem:[%s302 + $0xb8] sm:$0xff] %v2138
      %2171 = vst [vmem:[%s302 + $0xc0] sm:$0xff] %v2139
      %2172 = vst [vmem:[%s302 + $0xc8] sm:$0xff] %v2140
      %2173 = vst [vmem:[%s302 + $0xd0] sm:$0xff] %v2141
      %2174 = vst [vmem:[%s302 + $0xd8] sm:$0xff] %v2142
      %2175 = vst [vmem:[%s302 + $0xe0] sm:$0xff] %v2143
      %2176 = vst [vmem:[%s302 + $0xe8] sm:$0xff] %v2144
      %2177 = vst [vmem:[%s302 + $0xf0] sm:$0xff] %v2145
      %2178 = vst [vmem:[%s302 + $0xf8] sm:$0xff] %v2146
      %s2179 = smul.u32 32, %s21
      %p2180 = scmp.lt.s32.totalorder %s20, 1
      %s2181 = scalar_select %p2180, %s20, 1
      %p2182 = scmp.lt.s32.totalorder %s2179, 31
      %s2183 = scalar_select %p2182, %s2179, 31
      %s2184 = smul.addr %s2181, 32
      %s2185 = sadd.s32 %s2183, %s2184
      %s2186 = smul.addr %s2185, 8
      %s2187 = scalar_lea.vmem %s5, %s2186
      // Predicated region
      $region41: #{pam_forward.1} parent=39 // pred_check
        %p2188 = pneg %p170
      $region42: #{pam_forward.1} parent=39 // pred_check_branch
        %2190 = sbr.rel (%p2188) target = $region44
      $region43: #{pam_forward.1} parent=39 // pred_region
        %s2191 = smul.u32 32, %s21
      $region44: #{pam_forward.1} parent=39 // pred_fallthru
        _
    $region40: #{pam_forward.1} parent=5 // pred_fallthru
      _
    %p2192 = scmp.le.s32.totalorder 2, %s11
    // Predicated region
    $region45: #{pam_forward.1} parent=5 // pred_check
      %p2193 = pneg %p2192
    $region46: #{pam_forward.1} parent=5 // pred_check_branch
      %2195 = sbr.rel (%p2193) target = $region48
    $region47: #{pam_forward.1} parent=5 // pred_region
      %s2196 = ssub.s32 %s11, 2
      // Predicated region
      $region49: #{pam_forward.1} parent=47 // pred_check
        %p2197 = pneg %p176
      $region50: #{pam_forward.1} parent=47 // pred_check_branch
        %2199 = sbr.rel (%p2197) target = $region52
      $region51: #{pam_forward.1} parent=47 // pred_region
        %s2200 = smul.u32 32, %s23
        %p2201 = scmp.lt.s32.totalorder %s22, 1
        %s2202 = scalar_select %p2201, %s22, 1
        %p2203 = scmp.lt.s32.totalorder %s2200, 31
        %s2204 = scalar_select %p2203, %s2200, 31
        %s2205 = smul.addr %s2202, 32
        %s2206 = sadd.s32 %s2204, %s2205
        %s2207 = smul.addr %s2206, 8
        %s2208 = scalar_lea.vmem %s5, %s2207
      $region52: #{pam_forward.1} parent=47 // pred_fallthru
        _
    $region48: #{pam_forward.1} parent=5 // pred_fallthru
      _
  $region6: #{pam_forward.1} parent=0 // loop_footer
    %s15 = sadd.s32 1, %s11
  $region7: #{pam_forward.1} parent=0 // loop_footer_branch
    %10 = sbr.rel target = $region3
  $region8: #{pam_forward.1} parent=0 // loop_exit
    _

</llo_original>
